<compile_context>
chip_gen: v5e
topology: v5e:2x2
jax: 0.10.0
libtpu: 0.0.40
codegen_flags: <defaults>
</compile_context>

<pallas_src>
import jax
import jax.numpy as jnp
from jax.experimental import pallas as pl
from jax.experimental.pallas import tpu as pltpu


def _round_up(x, m):
    return ((x + m - 1) // m) * m


# ---------------------------------------------------------------------------
# Fused Pallas kernel: encoder -> mu -> decoder trunk -> concatenated heads
# ---------------------------------------------------------------------------
def _modvae_fused_kernel(x_ref,
                         ew1_ref, eb1_ref, ew2_ref, eb2_ref,
                         dw1_ref, db1_ref, dwh_ref, dbh_ref,
                         enc_ref, head_ref):
    # --- Encoder: ReLU(x @ W1 + b1) @ W2 + b2 -> (BM, L2_pad) -----------------
    # enc[:, :L] = mu, enc[:, L:2L] = logvar, enc[:, 2L:] = 0 (zero-padded W2/b2)
    x = x_ref[...].astype(jnp.bfloat16)
    h = jnp.dot(x, ew1_ref[...], preferred_element_type=jnp.float32)
    h = jnp.maximum(h + eb1_ref[...], 0.0)
    enc = jnp.dot(h.astype(jnp.bfloat16), ew2_ref[...],
                  preferred_element_type=jnp.float32) + eb2_ref[...]
    enc_ref[...] = enc.astype(enc_ref.dtype)

    # --- Decoder (eval: sampled_latent = mu) ----------------------------------
    # dw1 rows >= latent_dim are zero, so enc @ dw1 == mu @ W1_dec exactly.
    g = jnp.dot(enc.astype(jnp.bfloat16), dw1_ref[...],
                preferred_element_type=jnp.float32)
    g = jnp.maximum(g + db1_ref[...], 0.0)
    # Concatenated grid+sens head: one full-width MXU push, lane-dense store.
    head = jnp.dot(g.astype(jnp.bfloat16), dwh_ref[...],
                   preferred_element_type=jnp.float32) + dbh_ref[...]
    head_ref[...] = head.astype(head_ref.dtype)


def modvae_forward_pallas(x2d, params, *, bm=8):
    """x2d: (B, Din) f32. Returns (enc_out (Bp, L2_pad), head_out (Bp, Nh))."""
    ew1, eb1, ew2, eb2, dw1, db1, dwh, dbh = params
    B, Din = x2d.shape
    Din_p, He = ew1.shape
    L2p = ew2.shape[1]
    Hd = dw1.shape[1]
    Nh = dwh.shape[1]

    # Pad batch to a multiple of the sublane tile (8 for f32).
    Bp = _round_up(max(B, bm), bm)
    x_p = jnp.zeros((Bp, Din_p), jnp.float32).at[:B, :Din].set(x2d)
    n_bt = Bp // bm

    def full(shape):
        # Whole-array block, constant index -> DMA'd once, stays resident.
        return pl.BlockSpec(shape, lambda i: (0, 0))

    def row_tile(width):
        # Batch-tiled block (sharded across TensorCores via "parallel").
        return pl.BlockSpec((bm, width), lambda i: (i, 0))

    flops = 2 * Bp * (Din_p * He + He * L2p + L2p * Hd + Hd * Nh)
    bytes_accessed = (x_p.size * 4
                      + sum(int(a.size) * a.dtype.itemsize for a in params)
                      + Bp * (L2p + Nh) * 4)

    enc_out, head_out = pl.pallas_call(
        _modvae_fused_kernel,
        out_shape=(jax.ShapeDtypeStruct((Bp, L2p), jnp.float32),
                   jax.ShapeDtypeStruct((Bp, Nh), jnp.float32)),
        grid=(n_bt,),
        in_specs=[
            row_tile(Din_p),
            full((Din_p, He)), full((1, He)),
            full((He, L2p)), full((1, L2p)),
            full((L2p, Hd)), full((1, Hd)),
            full((Hd, Nh)), full((1, Nh)),
        ],
        out_specs=(row_tile(L2p), row_tile(Nh)),
        compiler_params=pltpu.CompilerParams(
            dimension_semantics=("parallel",)),
        cost_estimate=pl.CostEstimate(
            flops=flops, transcendentals=0, bytes_accessed=bytes_accessed),
    )(x_p, ew1, eb1, ew2, eb2, dw1, db1, dwh, dbh)
    return enc_out, head_out


# ---------------------------------------------------------------------------
# ModVAE wrapper (parameter construction + thin JAX glue)
# ---------------------------------------------------------------------------
class ModVAEPallas:
    def __init__(self, key, in_dim, enc_hidden, latent_dim, dec_hidden,
                 grid_dim, sens_dim):
        self.in_dim = in_dim
        self.latent_dim = latent_dim
        self.grid_dim = grid_dim
        self.sens_dim = sens_dim

        L = latent_dim
        Din_p = _round_up(in_dim, 128)
        He = _round_up(enc_hidden, 128)
        L2 = 2 * L
        L2p = _round_up(L2, 128)
        Hd = _round_up(dec_hidden, 128)
        Dg_p = _round_up(grid_dim, 128)
        Ds_p = _round_up(sens_dim, 128)
        self._dg_p = Dg_p

        ks = jax.random.split(key, 5)

        def lin_init(k, fan_in, fan_out):
            # deterministic, PyTorch-style U(-1/sqrt(fan_in), 1/sqrt(fan_in))
            bound = 1.0 / jnp.sqrt(jnp.float32(fan_in))
            kw, kb = jax.random.split(k)
            w = jax.random.uniform(kw, (fan_in, fan_out), jnp.float32, -bound, bound)
            b = jax.random.uniform(kb, (fan_out,), jnp.float32, -bound, bound)
            return w, b

        # EncoderVAE topology: [in_dim -> enc_hidden -> 2*latent_dim]
        e_w1, e_b1 = lin_init(ks[0], in_dim, enc_hidden)
        e_w2, e_b2 = lin_init(ks[1], enc_hidden, L2)
        # DecoderVAE topology: [latent_dim -> dec_hidden -> (grid_dim, sens_dim)]
        d_w1, d_b1 = lin_init(ks[2], latent_dim, dec_hidden)
        d_wg, d_bg = lin_init(ks[3], dec_hidden, grid_dim)
        d_ws, d_bs = lin_init(ks[4], dec_hidden, sens_dim)

        def pad_w(w, rows, cols):
            return jnp.zeros((rows, cols), jnp.float32).at[:w.shape[0], :w.shape[1]].set(w)

        def pad_b(b, cols):
            return jnp.zeros((1, cols), jnp.float32).at[0, :b.shape[0]].set(b)

        # Zero-pad to lane-dense shapes; weights bf16, biases f32.
        ew1 = pad_w(e_w1, Din_p, He).astype(jnp.bfloat16)
        eb1 = pad_b(e_b1, He)
        # Columns [0:L]=mu, [L:2L]=logvar (same column order as view(-1,2,L)),
        # padded columns beyond 2L are zero (weight and bias).
        ew2 = pad_w(e_w2, He, L2p).astype(jnp.bfloat16)
        eb2 = pad_b(e_b2, L2p)
        # Decoder trunk: rows >= L are zero so logvar / padding never contribute.
        dw1 = pad_w(d_w1, L2p, Hd).astype(jnp.bfloat16)
        db1 = pad_b(d_b1, Hd)
        # Concatenated grid+sens head, each head padded to a 128-lane multiple.
        dwh = jnp.zeros((Hd, Dg_p + Ds_p), jnp.float32)
        dwh = dwh.at[:dec_hidden, :grid_dim].set(d_wg)
        dwh = dwh.at[:dec_hidden, Dg_p:Dg_p + sens_dim].set(d_ws)
        dwh = dwh.astype(jnp.bfloat16)
        dbh = jnp.zeros((1, Dg_p + Ds_p), jnp.float32)
        dbh = dbh.at[0, :grid_dim].set(d_bg)
        dbh = dbh.at[0, Dg_p:Dg_p + sens_dim].set(d_bs)

        self.params = (ew1, eb1, ew2, eb2, dw1, db1, dwh, dbh)

    def __call__(self, x_nchw):
        B = x_nchw.shape[0]
        L = self.latent_dim
        x2d = x_nchw.reshape(B, -1).astype(jnp.float32)

        enc_out, head_out = modvae_forward_pallas(x2d, self.params)

        # Slice padded kernel outputs back to logical widths (cheap XLA slices).
        mu = enc_out[:B, :L]
        logvar = enc_out[:B, L:2 * L]
        grid_out = head_out[:B, :self.grid_dim]
        sens_out = head_out[:B, self._dg_p:self._dg_p + self.sens_dim]
        return grid_out, sens_out, mu, logvar


if __name__ == "__main__":
    key = jax.random.PRNGKey(0)
    k_param, k_x = jax.random.split(key)

    # Small shapes: batch=2, channels=4, spatial=16x16  ->  in_dim = 1024
    B, C, H, W = 2, 4, 16, 16
    in_dim = C * H * W
    latent_dim = 32
    enc_hidden = 128
    dec_hidden = 128
    grid_dim = in_dim          # grid reconstruction head
    sens_dim = 8               # sensor-output head

    model = ModVAEPallas(k_param, in_dim, enc_hidden, latent_dim,
                         dec_hidden, grid_dim, sens_dim)

    x = jax.random.normal(k_x, (B, C, H, W), dtype=jnp.float32)

    grid_out, sens_out, mu, logvar = model(x)
    jax.block_until_ready((grid_out, sens_out, mu, logvar))

    assert grid_out.shape == (B, grid_dim)
    assert sens_out.shape == (B, sens_dim)
    assert mu.shape == (B, latent_dim)
    assert logvar.shape == (B, latent_dim)
    assert bool(jnp.all(jnp.isfinite(grid_out)))
    assert bool(jnp.all(jnp.isfinite(sens_out)))

    print("KERNEL_OK")
</pallas_src>

<mosaic_0001>
module attributes {stable_mosaic.version = 11 : i64} {
  func.func @_modvae_fused_kernel(%arg0: i32, %arg1: memref<8x1024xf32, #tpu.memory_space<vmem>>, %arg2: memref<1024x128xbf16, #tpu.memory_space<vmem>>, %arg3: memref<1x128xf32, #tpu.memory_space<vmem>>, %arg4: memref<128x128xbf16, #tpu.memory_space<vmem>>, %arg5: memref<1x128xf32, #tpu.memory_space<vmem>>, %arg6: memref<128x128xbf16, #tpu.memory_space<vmem>>, %arg7: memref<1x128xf32, #tpu.memory_space<vmem>>, %arg8: memref<128x1152xbf16, #tpu.memory_space<vmem>>, %arg9: memref<1x1152xf32, #tpu.memory_space<vmem>>, %arg10: memref<8x128xf32, #tpu.memory_space<vmem>>, %arg11: memref<8x1152xf32, #tpu.memory_space<vmem>>) attributes {dimension_semantics = [#tpu.dimension_semantics<parallel>], iteration_bounds = array<i64: 1>, scalar_prefetch = 0 : i64, scratch_operands = 0 : i64, tpu.core_type = #tpu.core_type<tc>, window_params = [{transform_indices = @transform_0, window_bounds = array<i64: 8, 1024>}, {pipeline_mode = #tpu.pipeline_mode<synchronous>, transform_indices = @transform_1, window_bounds = array<i64: 1024, 128>}, {pipeline_mode = #tpu.pipeline_mode<synchronous>, transform_indices = @transform_2, window_bounds = array<i64: 1, 128>}, {pipeline_mode = #tpu.pipeline_mode<synchronous>, transform_indices = @transform_3, window_bounds = array<i64: 128, 128>}, {pipeline_mode = #tpu.pipeline_mode<synchronous>, transform_indices = @transform_4, window_bounds = array<i64: 1, 128>}, {pipeline_mode = #tpu.pipeline_mode<synchronous>, transform_indices = @transform_5, window_bounds = array<i64: 128, 128>}, {pipeline_mode = #tpu.pipeline_mode<synchronous>, transform_indices = @transform_6, window_bounds = array<i64: 1, 128>}, {pipeline_mode = #tpu.pipeline_mode<synchronous>, transform_indices = @transform_7, window_bounds = array<i64: 128, 1152>}, {pipeline_mode = #tpu.pipeline_mode<synchronous>, transform_indices = @transform_8, window_bounds = array<i64: 1, 1152>}, {transform_indices = @transform_9, window_bounds = array<i64: 8, 128>}, {transform_indices = @transform_10, window_bounds = array<i64: 8, 1152>}]} {
    %c0 = arith.constant 0 : index
    %c0_0 = arith.constant 0 : index
    %0 = vector.load %arg1[%c0, %c0_0] : memref<8x1024xf32, #tpu.memory_space<vmem>>, vector<8x1024xf32>
    %1 = arith.truncf %0 : vector<8x1024xf32> to vector<8x1024xbf16>
    %c0_1 = arith.constant 0 : index
    %c0_2 = arith.constant 0 : index
    %2 = vector.load %arg2[%c0_1, %c0_2] : memref<1024x128xbf16, #tpu.memory_space<vmem>>, vector<1024x128xbf16>
    %cst = arith.constant dense<0.000000e+00> : vector<8x128xf32>
    %3 = tpu.matmul %1, %2, %cst {dimension_numbers = #tpu.dot_dimension_numbers<[1], [0], [0], [1], [0, 0, 1, 1], [], []>} : vector<8x1024xbf16>, vector<1024x128xbf16>, vector<8x128xf32> -> vector<8x128xf32>
    %c0_3 = arith.constant 0 : index
    %c0_4 = arith.constant 0 : index
    %4 = vector.load %arg3[%c0_3, %c0_4] : memref<1x128xf32, #tpu.memory_space<vmem>>, vector<1x128xf32>
    %5 = vector.broadcast %4 : vector<1x128xf32> to vector<8x128xf32>
    %6 = arith.addf %3, %5 : vector<8x128xf32>
    %cst_5 = arith.constant 0.000000e+00 : f32
    %7 = vector.broadcast %cst_5 : f32 to vector<8x128xf32>
    %8 = arith.maximumf %6, %7 : vector<8x128xf32>
    %9 = arith.truncf %8 : vector<8x128xf32> to vector<8x128xbf16>
    %c0_6 = arith.constant 0 : index
    %c0_7 = arith.constant 0 : index
    %10 = vector.load %arg4[%c0_6, %c0_7] : memref<128x128xbf16, #tpu.memory_space<vmem>>, vector<128x128xbf16>
    %cst_8 = arith.constant dense<0.000000e+00> : vector<8x128xf32>
    %11 = tpu.matmul %9, %10, %cst_8 {dimension_numbers = #tpu.dot_dimension_numbers<[1], [0], [0], [1], [0, 0, 1, 1], [], []>} : vector<8x128xbf16>, vector<128x128xbf16>, vector<8x128xf32> -> vector<8x128xf32>
    %c0_9 = arith.constant 0 : index
    %c0_10 = arith.constant 0 : index
    %12 = vector.load %arg5[%c0_9, %c0_10] : memref<1x128xf32, #tpu.memory_space<vmem>>, vector<1x128xf32>
    %13 = vector.broadcast %12 : vector<1x128xf32> to vector<8x128xf32>
    %14 = arith.addf %11, %13 : vector<8x128xf32>
    %c0_11 = arith.constant 0 : index
    %c0_12 = arith.constant 0 : index
    %15 = vector.load %arg10[%c0_11, %c0_12] : memref<8x128xf32, #tpu.memory_space<vmem>>, vector<8x128xf32>
    tpu.vector_store %arg10[%c0_11, %c0_12], %14 {strides = array<i32>} : memref<8x128xf32, #tpu.memory_space<vmem>>, vector<8x128xf32>,
    %16 = arith.truncf %14 : vector<8x128xf32> to vector<8x128xbf16>
    %c0_13 = arith.constant 0 : index
    %c0_14 = arith.constant 0 : index
    %17 = vector.load %arg6[%c0_13, %c0_14] : memref<128x128xbf16, #tpu.memory_space<vmem>>, vector<128x128xbf16>
    %cst_15 = arith.constant dense<0.000000e+00> : vector<8x128xf32>
    %18 = tpu.matmul %16, %17, %cst_15 {dimension_numbers = #tpu.dot_dimension_numbers<[1], [0], [0], [1], [0, 0, 1, 1], [], []>} : vector<8x128xbf16>, vector<128x128xbf16>, vector<8x128xf32> -> vector<8x128xf32>
    %c0_16 = arith.constant 0 : index
    %c0_17 = arith.constant 0 : index
    %19 = vector.load %arg7[%c0_16, %c0_17] : memref<1x128xf32, #tpu.memory_space<vmem>>, vector<1x128xf32>
    %20 = vector.broadcast %19 : vector<1x128xf32> to vector<8x128xf32>
    %21 = arith.addf %18, %20 : vector<8x128xf32>
    %cst_18 = arith.constant 0.000000e+00 : f32
    %22 = vector.broadcast %cst_18 : f32 to vector<8x128xf32>
    %23 = arith.maximumf %21, %22 : vector<8x128xf32>
    %24 = arith.truncf %23 : vector<8x128xf32> to vector<8x128xbf16>
    %c0_19 = arith.constant 0 : index
    %c0_20 = arith.constant 0 : index
    %25 = vector.load %arg8[%c0_19, %c0_20] : memref<128x1152xbf16, #tpu.memory_space<vmem>>, vector<128x1152xbf16>
    %cst_21 = arith.constant dense<0.000000e+00> : vector<8x1152xf32>
    %26 = tpu.matmul %24, %25, %cst_21 {dimension_numbers = #tpu.dot_dimension_numbers<[1], [0], [0], [1], [0, 0, 1, 1], [], []>} : vector<8x128xbf16>, vector<128x1152xbf16>, vector<8x1152xf32> -> vector<8x1152xf32>
    %c0_22 = arith.constant 0 : index
    %c0_23 = arith.constant 0 : index
    %27 = vector.load %arg9[%c0_22, %c0_23] : memref<1x1152xf32, #tpu.memory_space<vmem>>, vector<1x1152xf32>
    %28 = vector.broadcast %27 : vector<1x1152xf32> to vector<8x1152xf32>
    %29 = arith.addf %26, %28 : vector<8x1152xf32>
    %c0_24 = arith.constant 0 : index
    %c0_25 = arith.constant 0 : index
    %30 = vector.load %arg11[%c0_24, %c0_25] : memref<8x1152xf32, #tpu.memory_space<vmem>>, vector<8x1152xf32>
    tpu.vector_store %arg11[%c0_24, %c0_25], %29 {strides = array<i32>} : memref<8x1152xf32, #tpu.memory_space<vmem>>, vector<8x1152xf32>,
    return
  }
  func.func @transform_0(%arg0: i32) -> (i32, i32) {
    %c0_i32 = arith.constant 0 : i32
    %c0_i32_0 = arith.constant 0 : i32
    return %arg0, %c0_i32 : i32, i32
  }
  func.func @transform_1(%arg0: i32) -> (i32, i32) {
    %c0_i32 = arith.constant 0 : i32
    %c0_i32_0 = arith.constant 0 : i32
    %c0_i32_1 = arith.constant 0 : i32
    return %c0_i32, %c0_i32_0 : i32, i32
  }
  func.func @transform_2(%arg0: i32) -> (i32, i32) {
    %c0_i32 = arith.constant 0 : i32
    %c0_i32_0 = arith.constant 0 : i32
    %c0_i32_1 = arith.constant 0 : i32
    return %c0_i32, %c0_i32_0 : i32, i32
  }
  func.func @transform_3(%arg0: i32) -> (i32, i32) {
    %c0_i32 = arith.constant 0 : i32
    %c0_i32_0 = arith.constant 0 : i32
    %c0_i32_1 = arith.constant 0 : i32
    return %c0_i32, %c0_i32_0 : i32, i32
  }
  func.func @transform_4(%arg0: i32) -> (i32, i32) {
    %c0_i32 = arith.constant 0 : i32
    %c0_i32_0 = arith.constant 0 : i32
    %c0_i32_1 = arith.constant 0 : i32
    return %c0_i32, %c0_i32_0 : i32, i32
  }
  func.func @transform_5(%arg0: i32) -> (i32, i32) {
    %c0_i32 = arith.constant 0 : i32
    %c0_i32_0 = arith.constant 0 : i32
    %c0_i32_1 = arith.constant 0 : i32
    return %c0_i32, %c0_i32_0 : i32, i32
  }
  func.func @transform_6(%arg0: i32) -> (i32, i32) {
    %c0_i32 = arith.constant 0 : i32
    %c0_i32_0 = arith.constant 0 : i32
    %c0_i32_1 = arith.constant 0 : i32
    return %c0_i32, %c0_i32_0 : i32, i32
  }
  func.func @transform_7(%arg0: i32) -> (i32, i32) {
    %c0_i32 = arith.constant 0 : i32
    %c0_i32_0 = arith.constant 0 : i32
    %c0_i32_1 = arith.constant 0 : i32
    return %c0_i32, %c0_i32_0 : i32, i32
  }
  func.func @transform_8(%arg0: i32) -> (i32, i32) {
    %c0_i32 = arith.constant 0 : i32
    %c0_i32_0 = arith.constant 0 : i32
    %c0_i32_1 = arith.constant 0 : i32
    return %c0_i32, %c0_i32_0 : i32, i32
  }
  func.func @transform_9(%arg0: i32) -> (i32, i32) {
    %c0_i32 = arith.constant 0 : i32
    %c0_i32_0 = arith.constant 0 : i32
    return %arg0, %c0_i32 : i32, i32
  }
  func.func @transform_10(%arg0: i32) -> (i32, i32) {
    %c0_i32 = arith.constant 0 : i32
    %c0_i32_0 = arith.constant 0 : i32
    return %arg0, %c0_i32 : i32, i32
  }
}

</mosaic_0001>

<llo_original>
// kernel: tpu_custom_call.1
$region0: #{tpu_custom_call.1}
  #allocation0 [shape = 'u32[]', space=smem, size = 0x4, offset = 0x4, fixed_abs, tag = 'smem constant byte address 0x4 - core index']
  #allocation1 [shape = 'u32[72,128]{1,0:T(1,128)}', space=vmem, size = 0x9000, scoped, tag = 'internal scratch']
  %s0 = inlined_call_operand.hbm [shape: f32[8,1024], index: 0, kind: input, shape index: {}]
  %s1 = inlined_call_operand.hbm [shape: bf16[1024,128], index: 1, kind: input, shape index: {}]
  %s2 = inlined_call_operand.vmem [shape: f32[1,128], index: 2, kind: input, shape index: {}]
  %s3 = inlined_call_operand.hbm [shape: bf16[128,128], index: 3, kind: input, shape index: {}]
  %s4 = inlined_call_operand.vmem [shape: f32[1,128], index: 4, kind: input, shape index: {}]
  %s5 = inlined_call_operand.hbm [shape: bf16[128,128], index: 5, kind: input, shape index: {}]
  %s6 = inlined_call_operand.vmem [shape: f32[1,128], index: 6, kind: input, shape index: {}]
  %s7 = inlined_call_operand.hbm [shape: bf16[128,1152], index: 7, kind: input, shape index: {}]
  %s8 = inlined_call_operand.hbm [shape: f32[1,1152], index: 8, kind: input, shape index: {}]
  %s9 = inlined_call_operand.hbm [shape: f32[8,128], index: 9, kind: output, shape index: {0}]
  %s10 = inlined_call_operand.hbm [shape: f32[8,1152], index: 10, kind: output, shape index: {1}]
  %11 = xla_tuple %s9, %s10
  %s12 = sld [smem:[#allocation0]]
  $region78: #{tpu_custom_call.1} parent=0
    _
  %s14 = ssub.s32 1, %s12
  %s15 = scalar_select 0, %s14, %s12
  $region1: #{tpu_custom_call.1} parent=0
    #allocation2 [shape = 'u8[32768]{0}', space=vmem, size = 0x8000, scoped, tag = 'input window, operand 0, single buffered']
    #allocation3 [shape = 's32[1]{0}', space=sflag, size = 0x4, scoped, tag = 'scoped memory for tpu_custom_call.1']
    #allocation4 [shape = 's32[1]{0}', space=sflag, size = 0x4, scoped, tag = 'scoped memory for tpu_custom_call.1']
    #allocation5 [shape = 'u8[262144]{0}', space=vmem, size = 0x40000, scoped, tag = 'input window, operand 1, single buffered']
    #allocation6 [shape = 's32[1]{0}', space=sflag, size = 0x4, scoped, tag = 'scoped memory for tpu_custom_call.1']
    #allocation7 [shape = 'u8[32768]{0}', space=vmem, size = 0x8000, scoped, tag = 'input window, operand 3, single buffered']
    #allocation8 [shape = 'u8[32768]{0}', space=vmem, size = 0x8000, scoped, tag = 'input window, operand 5, single buffered']
    #allocation9 [shape = 's32[1]{0}', space=sflag, size = 0x4, scoped, tag = 'scoped memory for tpu_custom_call.1']
    #allocation10 [shape = 'u8[294912]{0}', space=vmem, size = 0x48000, scoped, tag = 'input window, operand 7, single buffered']
    #allocation11 [shape = 'u8[4608]{0}', space=vmem, size = 0x1400, scoped, tag = 'input window, operand 8, single buffered']
    #allocation12 [shape = 's32[1]{0}', space=sflag, size = 0x4, scoped, tag = 'scoped memory for tpu_custom_call.1']
    #allocation13 [shape = 'u8[4096]{0}', space=vmem, size = 0x1000, scoped, tag = 'output window, operand 0, single buffered']
    #allocation14 [shape = 'u8[36864]{0}', space=vmem, size = 0x9000, scoped, tag = 'output window, operand 1, single buffered']
    #allocation15 [shape = 's32[1]{0}', space=sflag, size = 0x4, scoped, tag = 'scoped memory for tpu_custom_call.1']
    %16 = vsyncpa [#allocation3], 0
    %17 = vsyncpa [#allocation6], 0
    %18 = vsyncpa [#allocation9], 0
    %19 = vsyncpa [#allocation12], 0
    %20 = vsyncpa [#allocation4], 0
    %21 = vsyncpa [#allocation15], 0
    // Predicated region
    $region2: #{tpu_custom_call.1} parent=1 // pred_check
      _
    $region3: #{tpu_custom_call.1} parent=1 // pred_check_branch
      %23 = sbr.rel (0) target = $region5
    $region4: #{tpu_custom_call.1} parent=1 // pred_region
      %25 = vsyncadd [#allocation3], 0
      %s27 = sshll.u32 %s0, 4
      %s28 = int_to_ptr.hbm [resolvable:$true] %s27
      %s29 = sshll.u32 [#allocation2], 4
      %s30 = int_to_ptr.vmem [resolvable:$true] %s29
      %32 = dma.hbm_to_vmem [thread:$0]  %s28, 1024, %s30, [#allocation3]
    $region5: #{tpu_custom_call.1} parent=1 // pred_fallthru
      _
    // Predicated region
    $region6: #{tpu_custom_call.1} parent=1 // pred_check
      _
    $region7: #{tpu_custom_call.1} parent=1 // pred_check_branch
      %34 = sbr.rel (0) target = $region9
    $region8: #{tpu_custom_call.1} parent=1 // pred_region
      %36 = vsyncadd [#allocation6], 0
      %s37 = sshll.u32 %s1, 4
      %s38 = int_to_ptr.hbm [resolvable:$true] %s37
      %s39 = sshll.u32 [#allocation5], 4
      %s40 = int_to_ptr.vmem [resolvable:$true] %s39
      %45 = dma.hbm_to_vmem [thread:$0]  %s38, 8192, %s40, [#allocation6], 64, 64, 4
    $region9: #{tpu_custom_call.1} parent=1 // pred_fallthru
      _
    // Predicated region
    $region10: #{tpu_custom_call.1} parent=1 // pred_check
      _
    $region11: #{tpu_custom_call.1} parent=1 // pred_check_branch
      %47 = sbr.rel (0) target = $region13
    $region12: #{tpu_custom_call.1} parent=1 // pred_region
      _
    $region13: #{tpu_custom_call.1} parent=1 // pred_fallthru
      _
    // Predicated region
    $region14: #{tpu_custom_call.1} parent=1 // pred_check
      _
    $region15: #{tpu_custom_call.1} parent=1 // pred_check_branch
      %49 = sbr.rel (0) target = $region17
    $region16: #{tpu_custom_call.1} parent=1 // pred_region
      %51 = vsyncadd [#allocation6], 0
      %s52 = sshll.u32 %s3, 4
      %s53 = int_to_ptr.hbm [resolvable:$true] %s52
      %s54 = sshll.u32 [#allocation7], 4
      %s55 = int_to_ptr.vmem [resolvable:$true] %s54
      %60 = dma.hbm_to_vmem [thread:$0]  %s53, 1024, %s55, [#allocation6], 64, 64, 4
    $region17: #{tpu_custom_call.1} parent=1 // pred_fallthru
      _
    // Predicated region
    $region18: #{tpu_custom_call.1} parent=1 // pred_check
      _
    $region19: #{tpu_custom_call.1} parent=1 // pred_check_branch
      %62 = sbr.rel (0) target = $region21
    $region20: #{tpu_custom_call.1} parent=1 // pred_region
      _
    $region21: #{tpu_custom_call.1} parent=1 // pred_fallthru
      _
    // Predicated region
    $region22: #{tpu_custom_call.1} parent=1 // pred_check
      _
    $region23: #{tpu_custom_call.1} parent=1 // pred_check_branch
      %64 = sbr.rel (0) target = $region25
    $region24: #{tpu_custom_call.1} parent=1 // pred_region
      %66 = vsyncadd [#allocation9], 0
      %s67 = sshll.u32 %s5, 4
      %s68 = int_to_ptr.hbm [resolvable:$true] %s67
      %s69 = sshll.u32 [#allocation8], 4
      %s70 = int_to_ptr.vmem [resolvable:$true] %s69
      %75 = dma.hbm_to_vmem [thread:$0]  %s68, 1024, %s70, [#allocation9], 64, 64, 4
    $region25: #{tpu_custom_call.1} parent=1 // pred_fallthru
      _
    // Predicated region
    $region26: #{tpu_custom_call.1} parent=1 // pred_check
      _
    $region27: #{tpu_custom_call.1} parent=1 // pred_check_branch
      %77 = sbr.rel (0) target = $region29
    $region28: #{tpu_custom_call.1} parent=1 // pred_region
      _
    $region29: #{tpu_custom_call.1} parent=1 // pred_fallthru
      _
    // Predicated region
    $region30: #{tpu_custom_call.1} parent=1 // pred_check
      _
    $region31: #{tpu_custom_call.1} parent=1 // pred_check_branch
      %79 = sbr.rel (0) target = $region33
    $region32: #{tpu_custom_call.1} parent=1 // pred_region
      %81 = vsyncadd [#allocation9], 0
      %s82 = sshll.u32 %s7, 4
      %s83 = int_to_ptr.hbm [resolvable:$true] %s82
      %s84 = sshll.u32 [#allocation10], 4
      %s85 = int_to_ptr.vmem [resolvable:$true] %s84
      %90 = dma.hbm_to_vmem [thread:$0]  %s83, 9216, %s85, [#allocation9], 576, 576, 36
    $region33: #{tpu_custom_call.1} parent=1 // pred_fallthru
      _
    // Predicated region
    $region34: #{tpu_custom_call.1} parent=1 // pred_check
      _
    $region35: #{tpu_custom_call.1} parent=1 // pred_check_branch
      %92 = sbr.rel (0) target = $region37
    $region36: #{tpu_custom_call.1} parent=1 // pred_region
      %94 = vsyncadd [#allocation12], 0
      %s96 = sshll.u32 %s8, 4
      %s97 = int_to_ptr.hbm [resolvable:$true] %s96
      %s98 = sshll.u32 [#allocation11], 4
      %s99 = int_to_ptr.vmem [resolvable:$true] %s98
      %101 = dma.hbm_to_vmem [thread:$0]  %s97, 144, %s99, [#allocation12]
    $region37: #{tpu_custom_call.1} parent=1 // pred_fallthru
      _
    // Predicated region
    $region38: #{tpu_custom_call.1} parent=1 // pred_check
      _
    $region39: #{tpu_custom_call.1} parent=1 // pred_check_branch
      %103 = sbr.rel (0) target = $region41
    $region40: #{tpu_custom_call.1} parent=1 // pred_region
      %105 = dma.done [#allocation3], 1024
    $region41: #{tpu_custom_call.1} parent=1 // pred_fallthru
      _
    // Predicated region
    $region42: #{tpu_custom_call.1} parent=1 // pred_check
      _
    $region43: #{tpu_custom_call.1} parent=1 // pred_check_branch
      %107 = sbr.rel (0) target = $region45
    $region44: #{tpu_custom_call.1} parent=1 // pred_region
      %109 = dma.done [#allocation6], 8192
    $region45: #{tpu_custom_call.1} parent=1 // pred_fallthru
      _
    // Predicated region
    $region46: #{tpu_custom_call.1} parent=1 // pred_check
      _
    $region47: #{tpu_custom_call.1} parent=1 // pred_check_branch
      %111 = sbr.rel (0) target = $region49
    $region48: #{tpu_custom_call.1} parent=1 // pred_region
      %113 = dma.done [#allocation6], 1024
    $region49: #{tpu_custom_call.1} parent=1 // pred_fallthru
      _
    // Predicated region
    $region50: #{tpu_custom_call.1} parent=1 // pred_check
      _
    $region51: #{tpu_custom_call.1} parent=1 // pred_check_branch
      %115 = sbr.rel (0) target = $region53
    $region52: #{tpu_custom_call.1} parent=1 // pred_region
      %117 = dma.done [#allocation9], 1024
    $region53: #{tpu_custom_call.1} parent=1 // pred_fallthru
      _
    // Predicated region
    $region54: #{tpu_custom_call.1} parent=1 // pred_check
      _
    $region55: #{tpu_custom_call.1} parent=1 // pred_check_branch
      %119 = sbr.rel (0) target = $region57
    $region56: #{tpu_custom_call.1} parent=1 // pred_region
      %121 = dma.done [#allocation9], 9216
    $region57: #{tpu_custom_call.1} parent=1 // pred_fallthru
      _
    // Predicated region
    $region58: #{tpu_custom_call.1} parent=1 // pred_check
      _
    $region59: #{tpu_custom_call.1} parent=1 // pred_check_branch
      %123 = sbr.rel (0) target = $region61
    $region60: #{tpu_custom_call.1} parent=1 // pred_region
      %125 = dma.done [#allocation12], 144
    $region61: #{tpu_custom_call.1} parent=1 // pred_fallthru
      _
    %v126 = vld [vmem:[#allocation2] sm:$0xff]
    %v127 = vld [vmem:[#allocation2 + $0x8] sm:$0xff]
    %v128 = vld [vmem:[#allocation2 + $0x10] sm:$0xff]
    %v129 = vld [vmem:[#allocation2 + $0x18] sm:$0xff]
    %v130 = vld [vmem:[#allocation2 + $0x20] sm:$0xff]
    %v131 = vld [vmem:[#allocation2 + $0x28] sm:$0xff]
    %v132 = vld [vmem:[#allocation2 + $0x30] sm:$0xff]
    %v133 = vld [vmem:[#allocation2 + $0x38] sm:$0xff]
    %v134 = vpack.c.bf16 %v126, %v126
    %v135 = vpack.c.bf16 %v127, %v127
    %v136 = vpack.c.bf16 %v128, %v128
    %v137 = vpack.c.bf16 %v129, %v129
    %v138 = vpack.c.bf16 %v130, %v130
    %v139 = vpack.c.bf16 %v131, %v131
    %v140 = vpack.c.bf16 %v132, %v132
    %v141 = vpack.c.bf16 %v133, %v133
    %v142 = vld [vmem:[#allocation5] sm:$0xf]
    %v143 = vld [vmem:[#allocation5 + $0x4] sm:$0xf]
    %v144 = vld [vmem:[#allocation5 + $0x8] sm:$0xf]
    %v145 = vld [vmem:[#allocation5 + $0xc] sm:$0xf]
    %v146 = vld [vmem:[#allocation5 + $0x10] sm:$0xf]
    %v147 = vld [vmem:[#allocation5 + $0x14] sm:$0xf]
    %v148 = vld [vmem:[#allocation5 + $0x18] sm:$0xf]
    %v149 = vld [vmem:[#allocation5 + $0x1c] sm:$0xf]
    %v150 = vld [vmem:[#allocation5 + $0x20] sm:$0xf]
    %v151 = vld [vmem:[#allocation5 + $0x24] sm:$0xf]
    %v152 = vld [vmem:[#allocation5 + $0x28] sm:$0xf]
    %v153 = vld [vmem:[#allocation5 + $0x2c] sm:$0xf]
    %v154 = vld [vmem:[#allocation5 + $0x30] sm:$0xf]
    %v155 = vld [vmem:[#allocation5 + $0x34] sm:$0xf]
    %v156 = vld [vmem:[#allocation5 + $0x38] sm:$0xf]
    %v157 = vld [vmem:[#allocation5 + $0x3c] sm:$0xf]
    %v158 = vld [vmem:[#allocation5 + $0x40] sm:$0xf]
    %v159 = vld [vmem:[#allocation5 + $0x44] sm:$0xf]
    %v160 = vld [vmem:[#allocation5 + $0x48] sm:$0xf]
    %v161 = vld [vmem:[#allocation5 + $0x4c] sm:$0xf]
    %v162 = vld [vmem:[#allocation5 + $0x50] sm:$0xf]
    %v163 = vld [vmem:[#allocation5 + $0x54] sm:$0xf]
    %v164 = vld [vmem:[#allocation5 + $0x58] sm:$0xf]
    %v165 = vld [vmem:[#allocation5 + $0x5c] sm:$0xf]
    %v166 = vld [vmem:[#allocation5 + $0x60] sm:$0xf]
    %v167 = vld [vmem:[#allocation5 + $0x64] sm:$0xf]
    %v168 = vld [vmem:[#allocation5 + $0x68] sm:$0xf]
    %v169 = vld [vmem:[#allocation5 + $0x6c] sm:$0xf]
    %v170 = vld [vmem:[#allocation5 + $0x70] sm:$0xf]
    %v171 = vld [vmem:[#allocation5 + $0x74] sm:$0xf]
    %v172 = vld [vmem:[#allocation5 + $0x78] sm:$0xf]
    %v173 = vld [vmem:[#allocation5 + $0x7c] sm:$0xf]
    %v174 = vld [vmem:[#allocation5 + $0x80] sm:$0xf]
    %v175 = vld [vmem:[#allocation5 + $0x84] sm:$0xf]
    %v176 = vld [vmem:[#allocation5 + $0x88] sm:$0xf]
    %v177 = vld [vmem:[#allocation5 + $0x8c] sm:$0xf]
    %v178 = vld [vmem:[#allocation5 + $0x90] sm:$0xf]
    %v179 = vld [vmem:[#allocation5 + $0x94] sm:$0xf]
    %v180 = vld [vmem:[#allocation5 + $0x98] sm:$0xf]
    %v181 = vld [vmem:[#allocation5 + $0x9c] sm:$0xf]
    %v182 = vld [vmem:[#allocation5 + $0xa0] sm:$0xf]
    %v183 = vld [vmem:[#allocation5 + $0xa4] sm:$0xf]
    %v184 = vld [vmem:[#allocation5 + $0xa8] sm:$0xf]
    %v185 = vld [vmem:[#allocation5 + $0xac] sm:$0xf]
    %v186 = vld [vmem:[#allocation5 + $0xb0] sm:$0xf]
    %v187 = vld [vmem:[#allocation5 + $0xb4] sm:$0xf]
    %v188 = vld [vmem:[#allocation5 + $0xb8] sm:$0xf]
    %v189 = vld [vmem:[#allocation5 + $0xbc] sm:$0xf]
    %v190 = vld [vmem:[#allocation5 + $0xc0] sm:$0xf]
    %v191 = vld [vmem:[#allocation5 + $0xc4] sm:$0xf]
    %v192 = vld [vmem:[#allocation5 + $0xc8] sm:$0xf]
    %v193 = vld [vmem:[#allocation5 + $0xcc] sm:$0xf]
    %v194 = vld [vmem:[#allocation5 + $0xd0] sm:$0xf]
    %v195 = vld [vmem:[#allocation5 + $0xd4] sm:$0xf]
    %v196 = vld [vmem:[#allocation5 + $0xd8] sm:$0xf]
    %v197 = vld [vmem:[#allocation5 + $0xdc] sm:$0xf]
    %v198 = vld [vmem:[#allocation5 + $0xe0] sm:$0xf]
    %v199 = vld [vmem:[#allocation5 + $0xe4] sm:$0xf]
    %v200 = vld [vmem:[#allocation5 + $0xe8] sm:$0xf]
    %v201 = vld [vmem:[#allocation5 + $0xec] sm:$0xf]
    %v202 = vld [vmem:[#allocation5 + $0xf0] sm:$0xf]
    %v203 = vld [vmem:[#allocation5 + $0xf4] sm:$0xf]
    %v204 = vld [vmem:[#allocation5 + $0xf8] sm:$0xf]
    %v205 = vld [vmem:[#allocation5 + $0xfc] sm:$0xf]
    %v206 = vld [vmem:[#allocation5 + $0x100] sm:$0xf]
    %v207 = vld [vmem:[#allocation5 + $0x104] sm:$0xf]
    %v208 = vld [vmem:[#allocation5 + $0x108] sm:$0xf]
    %v209 = vld [vmem:[#allocation5 + $0x10c] sm:$0xf]
    %v210 = vld [vmem:[#allocation5 + $0x110] sm:$0xf]
    %v211 = vld [vmem:[#allocation5 + $0x114] sm:$0xf]
    %v212 = vld [vmem:[#allocation5 + $0x118] sm:$0xf]
    %v213 = vld [vmem:[#allocation5 + $0x11c] sm:$0xf]
    %v214 = vld [vmem:[#allocation5 + $0x120] sm:$0xf]
    %v215 = vld [vmem:[#allocation5 + $0x124] sm:$0xf]
    %v216 = vld [vmem:[#allocation5 + $0x128] sm:$0xf]
    %v217 = vld [vmem:[#allocation5 + $0x12c] sm:$0xf]
    %v218 = vld [vmem:[#allocation5 + $0x130] sm:$0xf]
    %v219 = vld [vmem:[#allocation5 + $0x134] sm:$0xf]
    %v220 = vld [vmem:[#allocation5 + $0x138] sm:$0xf]
    %v221 = vld [vmem:[#allocation5 + $0x13c] sm:$0xf]
    %v222 = vld [vmem:[#allocation5 + $0x140] sm:$0xf]
    %v223 = vld [vmem:[#allocation5 + $0x144] sm:$0xf]
    %v224 = vld [vmem:[#allocation5 + $0x148] sm:$0xf]
    %v225 = vld [vmem:[#allocation5 + $0x14c] sm:$0xf]
    %v226 = vld [vmem:[#allocation5 + $0x150] sm:$0xf]
    %v227 = vld [vmem:[#allocation5 + $0x154] sm:$0xf]
    %v228 = vld [vmem:[#allocation5 + $0x158] sm:$0xf]
    %v229 = vld [vmem:[#allocation5 + $0x15c] sm:$0xf]
    %v230 = vld [vmem:[#allocation5 + $0x160] sm:$0xf]
    %v231 = vld [vmem:[#allocation5 + $0x164] sm:$0xf]
    %v232 = vld [vmem:[#allocation5 + $0x168] sm:$0xf]
    %v233 = vld [vmem:[#allocation5 + $0x16c] sm:$0xf]
    %v234 = vld [vmem:[#allocation5 + $0x170] sm:$0xf]
    %v235 = vld [vmem:[#allocation5 + $0x174] sm:$0xf]
    %v236 = vld [vmem:[#allocation5 + $0x178] sm:$0xf]
    %v237 = vld [vmem:[#allocation5 + $0x17c] sm:$0xf]
    %v238 = vld [vmem:[#allocation5 + $0x180] sm:$0xf]
    %v239 = vld [vmem:[#allocation5 + $0x184] sm:$0xf]
    %v240 = vld [vmem:[#allocation5 + $0x188] sm:$0xf]
    %v241 = vld [vmem:[#allocation5 + $0x18c] sm:$0xf]
    %v242 = vld [vmem:[#allocation5 + $0x190] sm:$0xf]
    %v243 = vld [vmem:[#allocation5 + $0x194] sm:$0xf]
    %v244 = vld [vmem:[#allocation5 + $0x198] sm:$0xf]
    %v245 = vld [vmem:[#allocation5 + $0x19c] sm:$0xf]
    %v246 = vld [vmem:[#allocation5 + $0x1a0] sm:$0xf]
    %v247 = vld [vmem:[#allocation5 + $0x1a4] sm:$0xf]
    %v248 = vld [vmem:[#allocation5 + $0x1a8] sm:$0xf]
    %v249 = vld [vmem:[#allocation5 + $0x1ac] sm:$0xf]
    %v250 = vld [vmem:[#allocation5 + $0x1b0] sm:$0xf]
    %v251 = vld [vmem:[#allocation5 + $0x1b4] sm:$0xf]
    %v252 = vld [vmem:[#allocation5 + $0x1b8] sm:$0xf]
    %v253 = vld [vmem:[#allocation5 + $0x1bc] sm:$0xf]
    %v254 = vld [vmem:[#allocation5 + $0x1c0] sm:$0xf]
    %v255 = vld [vmem:[#allocation5 + $0x1c4] sm:$0xf]
    %v256 = vld [vmem:[#allocation5 + $0x1c8] sm:$0xf]
    %v257 = vld [vmem:[#allocation5 + $0x1cc] sm:$0xf]
    %v258 = vld [vmem:[#allocation5 + $0x1d0] sm:$0xf]
    %v259 = vld [vmem:[#allocation5 + $0x1d4] sm:$0xf]
    %v260 = vld [vmem:[#allocation5 + $0x1d8] sm:$0xf]
    %v261 = vld [vmem:[#allocation5 + $0x1dc] sm:$0xf]
    %v262 = vld [vmem:[#allocation5 + $0x1e0] sm:$0xf]
    %v263 = vld [vmem:[#allocation5 + $0x1e4] sm:$0xf]
    %v264 = vld [vmem:[#allocation5 + $0x1e8] sm:$0xf]
    %v265 = vld [vmem:[#allocation5 + $0x1ec] sm:$0xf]
    %v266 = vld [vmem:[#allocation5 + $0x1f0] sm:$0xf]
    %v267 = vld [vmem:[#allocation5 + $0x1f4] sm:$0xf]
    %v268 = vld [vmem:[#allocation5 + $0x1f8] sm:$0xf]
    %v269 = vld [vmem:[#allocation5 + $0x1fc] sm:$0xf]
    %v270 = vld [vmem:[%s2] sm:$0x1]
    %v272 = vperm.slane %v270, 0
    %v402 = vunpack.c.l.b16 %v142
    %v403 = vunpack.c.l.b16 %v143
    %v404 = vunpack.c.l.b16 %v144
    %v405 = vunpack.c.l.b16 %v145
    %v406 = vunpack.c.l.b16 %v146
    %v407 = vunpack.c.l.b16 %v147
    %v408 = vunpack.c.l.b16 %v148
    %v409 = vunpack.c.l.b16 %v149
    %v410 = vunpack.c.l.b16 %v150
    %v411 = vunpack.c.l.b16 %v151
    %v412 = vunpack.c.l.b16 %v152
    %v413 = vunpack.c.l.b16 %v153
    %v414 = vunpack.c.l.b16 %v154
    %v415 = vunpack.c.l.b16 %v155
    %v416 = vunpack.c.l.b16 %v156
    %v417 = vunpack.c.l.b16 %v157
    %v418 = vunpack.c.l.b16 %v158
    %v419 = vunpack.c.l.b16 %v159
    %v420 = vunpack.c.l.b16 %v160
    %v421 = vunpack.c.l.b16 %v161
    %v422 = vunpack.c.l.b16 %v162
    %v423 = vunpack.c.l.b16 %v163
    %v424 = vunpack.c.l.b16 %v164
    %v425 = vunpack.c.l.b16 %v165
    %v426 = vunpack.c.l.b16 %v166
    %v427 = vunpack.c.l.b16 %v167
    %v428 = vunpack.c.l.b16 %v168
    %v429 = vunpack.c.l.b16 %v169
    %v430 = vunpack.c.l.b16 %v170
    %v431 = vunpack.c.l.b16 %v171
    %v432 = vunpack.c.l.b16 %v172
    %v433 = vunpack.c.l.b16 %v173
    %v434 = vunpack.c.l.b16 %v174
    %v435 = vunpack.c.l.b16 %v175
    %v436 = vunpack.c.l.b16 %v176
    %v437 = vunpack.c.l.b16 %v177
    %v438 = vunpack.c.l.b16 %v178
    %v439 = vunpack.c.l.b16 %v179
    %v440 = vunpack.c.l.b16 %v180
    %v441 = vunpack.c.l.b16 %v181
    %v442 = vunpack.c.l.b16 %v182
    %v443 = vunpack.c.l.b16 %v183
    %v444 = vunpack.c.l.b16 %v184
    %v445 = vunpack.c.l.b16 %v185
    %v446 = vunpack.c.l.b16 %v186
    %v447 = vunpack.c.l.b16 %v187
    %v448 = vunpack.c.l.b16 %v188
    %v449 = vunpack.c.l.b16 %v189
    %v450 = vunpack.c.l.b16 %v190
    %v451 = vunpack.c.l.b16 %v191
    %v452 = vunpack.c.l.b16 %v192
    %v453 = vunpack.c.l.b16 %v193
    %v454 = vunpack.c.l.b16 %v194
    %v455 = vunpack.c.l.b16 %v195
    %v456 = vunpack.c.l.b16 %v196
    %v457 = vunpack.c.l.b16 %v197
    %v458 = vunpack.c.l.b16 %v198
    %v459 = vunpack.c.l.b16 %v199
    %v460 = vunpack.c.l.b16 %v200
    %v461 = vunpack.c.l.b16 %v201
    %v462 = vunpack.c.l.b16 %v202
    %v463 = vunpack.c.l.b16 %v203
    %v464 = vunpack.c.l.b16 %v204
    %v465 = vunpack.c.l.b16 %v205
    %v466 = vunpack.c.l.b16 %v206
    %v467 = vunpack.c.l.b16 %v207
    %v468 = vunpack.c.l.b16 %v208
    %v469 = vunpack.c.l.b16 %v209
    %v470 = vunpack.c.l.b16 %v210
    %v471 = vunpack.c.l.b16 %v211
    %v472 = vunpack.c.l.b16 %v212
    %v473 = vunpack.c.l.b16 %v213
    %v474 = vunpack.c.l.b16 %v214
    %v475 = vunpack.c.l.b16 %v215
    %v476 = vunpack.c.l.b16 %v216
    %v477 = vunpack.c.l.b16 %v217
    %v478 = vunpack.c.l.b16 %v218
    %v479 = vunpack.c.l.b16 %v219
    %v480 = vunpack.c.l.b16 %v220
    %v481 = vunpack.c.l.b16 %v221
    %v482 = vunpack.c.l.b16 %v222
    %v483 = vunpack.c.l.b16 %v223
    %v484 = vunpack.c.l.b16 %v224
    %v485 = vunpack.c.l.b16 %v225
    %v486 = vunpack.c.l.b16 %v226
    %v487 = vunpack.c.l.b16 %v227
    %v488 = vunpack.c.l.b16 %v228
    %v489 = vunpack.c.l.b16 %v229
    %v490 = vunpack.c.l.b16 %v230
    %v491 = vunpack.c.l.b16 %v231
    %v492 = vunpack.c.l.b16 %v232
    %v493 = vunpack.c.l.b16 %v233
    %v494 = vunpack.c.l.b16 %v234
    %v495 = vunpack.c.l.b16 %v235
    %v496 = vunpack.c.l.b16 %v236
    %v497 = vunpack.c.l.b16 %v237
    %v498 = vunpack.c.l.b16 %v238
    %v499 = vunpack.c.l.b16 %v239
    %v500 = vunpack.c.l.b16 %v240
    %v501 = vunpack.c.l.b16 %v241
    %v502 = vunpack.c.l.b16 %v242
    %v503 = vunpack.c.l.b16 %v243
    %v504 = vunpack.c.l.b16 %v244
    %v505 = vunpack.c.l.b16 %v245
    %v506 = vunpack.c.l.b16 %v246
    %v507 = vunpack.c.l.b16 %v247
    %v508 = vunpack.c.l.b16 %v248
    %v509 = vunpack.c.l.b16 %v249
    %v510 = vunpack.c.l.b16 %v250
    %v511 = vunpack.c.l.b16 %v251
    %v512 = vunpack.c.l.b16 %v252
    %v513 = vunpack.c.l.b16 %v253
    %v514 = vunpack.c.l.b16 %v254
    %v515 = vunpack.c.l.b16 %v255
    %v516 = vunpack.c.l.b16 %v256
    %v517 = vunpack.c.l.b16 %v257
    %v518 = vunpack.c.l.b16 %v258
    %v519 = vunpack.c.l.b16 %v259
    %v520 = vunpack.c.l.b16 %v260
    %v521 = vunpack.c.l.b16 %v261
    %v522 = vunpack.c.l.b16 %v262
    %v523 = vunpack.c.l.b16 %v263
    %v524 = vunpack.c.l.b16 %v264
    %v525 = vunpack.c.l.b16 %v265
    %v526 = vunpack.c.l.b16 %v266
    %v527 = vunpack.c.l.b16 %v267
    %v528 = vunpack.c.l.b16 %v268
    %v529 = vunpack.c.l.b16 %v269
    %v530 = vpack.c.b16 %v403, %v402
    %v531 = vpack.c.b16 %v405, %v404
    %v532 = vpack.c.b16 %v407, %v406
    %v533 = vpack.c.b16 %v409, %v408
    %v534 = vpack.c.b16 %v411, %v410
    %v535 = vpack.c.b16 %v413, %v412
    %v536 = vpack.c.b16 %v415, %v414
    %v537 = vpack.c.b16 %v417, %v416
    %v538 = vpack.c.b16 %v419, %v418
    %v539 = vpack.c.b16 %v421, %v420
    %v540 = vpack.c.b16 %v423, %v422
    %v541 = vpack.c.b16 %v425, %v424
    %v542 = vpack.c.b16 %v427, %v426
    %v543 = vpack.c.b16 %v429, %v428
    %v544 = vpack.c.b16 %v431, %v430
    %v545 = vpack.c.b16 %v433, %v432
    %v546 = vpack.c.b16 %v435, %v434
    %v547 = vpack.c.b16 %v437, %v436
    %v548 = vpack.c.b16 %v439, %v438
    %v549 = vpack.c.b16 %v441, %v440
    %v550 = vpack.c.b16 %v443, %v442
    %v551 = vpack.c.b16 %v445, %v444
    %v552 = vpack.c.b16 %v447, %v446
    %v553 = vpack.c.b16 %v449, %v448
    %v554 = vpack.c.b16 %v451, %v450
    %v555 = vpack.c.b16 %v453, %v452
    %v556 = vpack.c.b16 %v455, %v454
    %v557 = vpack.c.b16 %v457, %v456
    %v558 = vpack.c.b16 %v459, %v458
    %v559 = vpack.c.b16 %v461, %v460
    %v560 = vpack.c.b16 %v463, %v462
    %v561 = vpack.c.b16 %v465, %v464
    %v562 = vpack.c.b16 %v467, %v466
    %v563 = vpack.c.b16 %v469, %v468
    %v564 = vpack.c.b16 %v471, %v470
    %v565 = vpack.c.b16 %v473, %v472
    %v566 = vpack.c.b16 %v475, %v474
    %v567 = vpack.c.b16 %v477, %v476
    %v568 = vpack.c.b16 %v479, %v478
    %v569 = vpack.c.b16 %v481, %v480
    %v570 = vpack.c.b16 %v483, %v482
    %v571 = vpack.c.b16 %v485, %v484
    %v572 = vpack.c.b16 %v487, %v486
    %v573 = vpack.c.b16 %v489, %v488
    %v574 = vpack.c.b16 %v491, %v490
    %v575 = vpack.c.b16 %v493, %v492
    %v576 = vpack.c.b16 %v495, %v494
    %v577 = vpack.c.b16 %v497, %v496
    %v578 = vpack.c.b16 %v499, %v498
    %v579 = vpack.c.b16 %v501, %v500
    %v580 = vpack.c.b16 %v503, %v502
    %v581 = vpack.c.b16 %v505, %v504
    %v582 = vpack.c.b16 %v507, %v506
    %v583 = vpack.c.b16 %v509, %v508
    %v584 = vpack.c.b16 %v511, %v510
    %v585 = vpack.c.b16 %v513, %v512
    %v586 = vpack.c.b16 %v515, %v514
    %v587 = vpack.c.b16 %v517, %v516
    %v588 = vpack.c.b16 %v519, %v518
    %v589 = vpack.c.b16 %v521, %v520
    %v590 = vpack.c.b16 %v523, %v522
    %v591 = vpack.c.b16 %v525, %v524
    %v592 = vpack.c.b16 %v527, %v526
    %v593 = vpack.c.b16 %v529, %v528
    %658 = vmatpush.bf16.msra.mxu0 %v537
    %659 = vmatpush.bf16.msra.mxu0 %v536
    %660 = vmatpush.bf16.msra.mxu0 %v535
    %661 = vmatpush.bf16.msra.mxu0 %v534
    %662 = vmatpush.bf16.msra.mxu0 %v533
    %663 = vmatpush.bf16.msra.mxu0 %v532
    %664 = vmatpush.bf16.msra.mxu0 %v531
    %665 = vmatpush.bf16.msra.mxu0 %v530
    %666 = vmatmul.bf16.gmra.mxu0 %v134
    %v667 = vpop.f32.mrf.mxu0
    %v668 = vadd.f32 %v272, %v667
    %v669 = vpop.f32.mrf.mxu0
    %670 = vdwg.mxu0
    %671 = vmatpush.bf16.msra.mxu0 %v545
    %672 = vmatpush.bf16.msra.mxu0 %v544
    %673 = vmatpush.bf16.msra.mxu0 %v543
    %674 = vmatpush.bf16.msra.mxu0 %v542
    %675 = vmatpush.bf16.msra.mxu0 %v541
    %676 = vmatpush.bf16.msra.mxu0 %v540
    %677 = vmatpush.bf16.msra.mxu0 %v539
    %678 = vmatpush.bf16.msra.mxu0 %v538
    %679 = vmatmul.bf16.gmra.mxu0 %v135
    %v680 = vpop.f32.mrf.mxu0
    %v681 = vadd.f32 %v668, %v680
    %v682 = vpop.f32.mrf.mxu0
    %683 = vdwg.mxu0
    %684 = vmatpush.bf16.msra.mxu0 %v553
    %685 = vmatpush.bf16.msra.mxu0 %v552
    %686 = vmatpush.bf16.msra.mxu0 %v551
    %687 = vmatpush.bf16.msra.mxu0 %v550
    %688 = vmatpush.bf16.msra.mxu0 %v549
    %689 = vmatpush.bf16.msra.mxu0 %v548
    %690 = vmatpush.bf16.msra.mxu0 %v547
    %691 = vmatpush.bf16.msra.mxu0 %v546
    %692 = vmatmul.bf16.gmra.mxu0 %v136
    %v693 = vpop.f32.mrf.mxu0
    %v694 = vadd.f32 %v681, %v693
    %v695 = vpop.f32.mrf.mxu0
    %696 = vdwg.mxu0
    %697 = vmatpush.bf16.msra.mxu0 %v561
    %698 = vmatpush.bf16.msra.mxu0 %v560
    %699 = vmatpush.bf16.msra.mxu0 %v559
    %700 = vmatpush.bf16.msra.mxu0 %v558
    %701 = vmatpush.bf16.msra.mxu0 %v557
    %702 = vmatpush.bf16.msra.mxu0 %v556
    %703 = vmatpush.bf16.msra.mxu0 %v555
    %704 = vmatpush.bf16.msra.mxu0 %v554
    %705 = vmatmul.bf16.gmra.mxu0 %v137
    %v706 = vpop.f32.mrf.mxu0
    %v707 = vadd.f32 %v694, %v706
    %v708 = vpop.f32.mrf.mxu0
    %709 = vdwg.mxu0
    %710 = vmatpush.bf16.msra.mxu0 %v569
    %711 = vmatpush.bf16.msra.mxu0 %v568
    %712 = vmatpush.bf16.msra.mxu0 %v567
    %713 = vmatpush.bf16.msra.mxu0 %v566
    %714 = vmatpush.bf16.msra.mxu0 %v565
    %715 = vmatpush.bf16.msra.mxu0 %v564
    %716 = vmatpush.bf16.msra.mxu0 %v563
    %717 = vmatpush.bf16.msra.mxu0 %v562
    %718 = vmatmul.bf16.gmra.mxu0 %v138
    %v719 = vpop.f32.mrf.mxu0
    %v720 = vadd.f32 %v707, %v719
    %v721 = vpop.f32.mrf.mxu0
    %722 = vdwg.mxu0
    %723 = vmatpush.bf16.msra.mxu0 %v577
    %724 = vmatpush.bf16.msra.mxu0 %v576
    %725 = vmatpush.bf16.msra.mxu0 %v575
    %726 = vmatpush.bf16.msra.mxu0 %v574
    %727 = vmatpush.bf16.msra.mxu0 %v573
    %728 = vmatpush.bf16.msra.mxu0 %v572
    %729 = vmatpush.bf16.msra.mxu0 %v571
    %730 = vmatpush.bf16.msra.mxu0 %v570
    %731 = vmatmul.bf16.gmra.mxu0 %v139
    %v732 = vpop.f32.mrf.mxu0
    %v733 = vadd.f32 %v720, %v732
    %v734 = vpop.f32.mrf.mxu0
    %735 = vdwg.mxu0
    %736 = vmatpush.bf16.msra.mxu0 %v585
    %737 = vmatpush.bf16.msra.mxu0 %v584
    %738 = vmatpush.bf16.msra.mxu0 %v583
    %739 = vmatpush.bf16.msra.mxu0 %v582
    %740 = vmatpush.bf16.msra.mxu0 %v581
    %741 = vmatpush.bf16.msra.mxu0 %v580
    %742 = vmatpush.bf16.msra.mxu0 %v579
    %743 = vmatpush.bf16.msra.mxu0 %v578
    %744 = vmatmul.bf16.gmra.mxu0 %v140
    %v745 = vpop.f32.mrf.mxu0
    %v746 = vadd.f32 %v733, %v745
    %v747 = vpop.f32.mrf.mxu0
    %748 = vdwg.mxu0
    %749 = vmatpush.bf16.msra.mxu0 %v593
    %750 = vmatpush.bf16.msra.mxu0 %v592
    %751 = vmatpush.bf16.msra.mxu0 %v591
    %752 = vmatpush.bf16.msra.mxu0 %v590
    %753 = vmatpush.bf16.msra.mxu0 %v589
    %754 = vmatpush.bf16.msra.mxu0 %v588
    %755 = vmatpush.bf16.msra.mxu0 %v587
    %756 = vmatpush.bf16.msra.mxu0 %v586
    %757 = vmatmul.bf16.gmra.mxu0 %v141
    %v758 = vpop.f32.mrf.mxu0
    %v759 = vadd.f32 %v746, %v758
    %v760 = vpop.f32.mrf.mxu0
    %761 = vdwg.mxu0
    %v762 = vmax.f32 %v759, 0.0
    %v763 = vpack.c.bf16 %v762, %v762
    %v764 = vld [vmem:[#allocation7] sm:$0xf]
    %v765 = vld [vmem:[#allocation7 + $0x4] sm:$0xf]
    %v766 = vld [vmem:[#allocation7 + $0x8] sm:$0xf]
    %v767 = vld [vmem:[#allocation7 + $0xc] sm:$0xf]
    %v768 = vld [vmem:[#allocation7 + $0x10] sm:$0xf]
    %v769 = vld [vmem:[#allocation7 + $0x14] sm:$0xf]
    %v770 = vld [vmem:[#allocation7 + $0x18] sm:$0xf]
    %v771 = vld [vmem:[#allocation7 + $0x1c] sm:$0xf]
    %v772 = vld [vmem:[#allocation7 + $0x20] sm:$0xf]
    %v773 = vld [vmem:[#allocation7 + $0x24] sm:$0xf]
    %v774 = vld [vmem:[#allocation7 + $0x28] sm:$0xf]
    %v775 = vld [vmem:[#allocation7 + $0x2c] sm:$0xf]
    %v776 = vld [vmem:[#allocation7 + $0x30] sm:$0xf]
    %v777 = vld [vmem:[#allocation7 + $0x34] sm:$0xf]
    %v778 = vld [vmem:[#allocation7 + $0x38] sm:$0xf]
    %v779 = vld [vmem:[#allocation7 + $0x3c] sm:$0xf]
    %v780 = vld [vmem:[%s4] sm:$0x1]
    %v782 = vperm.slane %v780, 0
    %v800 = vunpack.c.l.b16 %v764
    %v801 = vunpack.c.l.b16 %v765
    %v802 = vunpack.c.l.b16 %v766
    %v803 = vunpack.c.l.b16 %v767
    %v804 = vunpack.c.l.b16 %v768
    %v805 = vunpack.c.l.b16 %v769
    %v806 = vunpack.c.l.b16 %v770
    %v807 = vunpack.c.l.b16 %v771
    %v808 = vunpack.c.l.b16 %v772
    %v809 = vunpack.c.l.b16 %v773
    %v810 = vunpack.c.l.b16 %v774
    %v811 = vunpack.c.l.b16 %v775
    %v812 = vunpack.c.l.b16 %v776
    %v813 = vunpack.c.l.b16 %v777
    %v814 = vunpack.c.l.b16 %v778
    %v815 = vunpack.c.l.b16 %v779
    %v816 = vpack.c.b16 %v801, %v800
    %v817 = vpack.c.b16 %v803, %v802
    %v818 = vpack.c.b16 %v805, %v804
    %v819 = vpack.c.b16 %v807, %v806
    %v820 = vpack.c.b16 %v809, %v808
    %v821 = vpack.c.b16 %v811, %v810
    %v822 = vpack.c.b16 %v813, %v812
    %v823 = vpack.c.b16 %v815, %v814
    %832 = vmatpush.bf16.msra.mxu0 %v823
    %833 = vmatpush.bf16.msra.mxu0 %v822
    %834 = vmatpush.bf16.msra.mxu0 %v821
    %835 = vmatpush.bf16.msra.mxu0 %v820
    %836 = vmatpush.bf16.msra.mxu0 %v819
    %837 = vmatpush.bf16.msra.mxu0 %v818
    %838 = vmatpush.bf16.msra.mxu0 %v817
    %839 = vmatpush.bf16.msra.mxu0 %v816
    %840 = vmatmul.bf16.gmra.mxu0 %v763
    %v841 = vpop.f32.mrf.mxu0
    %v842 = vadd.f32 %v782, %v841
    %v843 = vpop.f32.mrf.mxu0
    %844 = vdwg.mxu0
    %845 = vst [vmem:[#allocation13] sm:$0xff] %v842
    %v846 = vpack.c.bf16 %v842, %v842
    %v847 = vld [vmem:[#allocation8] sm:$0xf]
    %v848 = vld [vmem:[#allocation8 + $0x4] sm:$0xf]
    %v849 = vld [vmem:[#allocation8 + $0x8] sm:$0xf]
    %v850 = vld [vmem:[#allocation8 + $0xc] sm:$0xf]
    %v851 = vld [vmem:[#allocation8 + $0x10] sm:$0xf]
    %v852 = vld [vmem:[#allocation8 + $0x14] sm:$0xf]
    %v853 = vld [vmem:[#allocation8 + $0x18] sm:$0xf]
    %v854 = vld [vmem:[#allocation8 + $0x1c] sm:$0xf]
    %v855 = vld [vmem:[#allocation8 + $0x20] sm:$0xf]
    %v856 = vld [vmem:[#allocation8 + $0x24] sm:$0xf]
    %v857 = vld [vmem:[#allocation8 + $0x28] sm:$0xf]
    %v858 = vld [vmem:[#allocation8 + $0x2c] sm:$0xf]
    %v859 = vld [vmem:[#allocation8 + $0x30] sm:$0xf]
    %v860 = vld [vmem:[#allocation8 + $0x34] sm:$0xf]
    %v861 = vld [vmem:[#allocation8 + $0x38] sm:$0xf]
    %v862 = vld [vmem:[#allocation8 + $0x3c] sm:$0xf]
    %v863 = vld [vmem:[%s6] sm:$0x1]
    %v865 = vperm.slane %v863, 0
    %v883 = vunpack.c.l.b16 %v847
    %v884 = vunpack.c.l.b16 %v848
    %v885 = vunpack.c.l.b16 %v849
    %v886 = vunpack.c.l.b16 %v850
    %v887 = vunpack.c.l.b16 %v851
    %v888 = vunpack.c.l.b16 %v852
    %v889 = vunpack.c.l.b16 %v853
    %v890 = vunpack.c.l.b16 %v854
    %v891 = vunpack.c.l.b16 %v855
    %v892 = vunpack.c.l.b16 %v856
    %v893 = vunpack.c.l.b16 %v857
    %v894 = vunpack.c.l.b16 %v858
    %v895 = vunpack.c.l.b16 %v859
    %v896 = vunpack.c.l.b16 %v860
    %v897 = vunpack.c.l.b16 %v861
    %v898 = vunpack.c.l.b16 %v862
    %v899 = vpack.c.b16 %v884, %v883
    %v900 = vpack.c.b16 %v886, %v885
    %v901 = vpack.c.b16 %v888, %v887
    %v902 = vpack.c.b16 %v890, %v889
    %v903 = vpack.c.b16 %v892, %v891
    %v904 = vpack.c.b16 %v894, %v893
    %v905 = vpack.c.b16 %v896, %v895
    %v906 = vpack.c.b16 %v898, %v897
    %915 = vmatpush.bf16.msra.mxu0 %v906
    %916 = vmatpush.bf16.msra.mxu0 %v905
    %917 = vmatpush.bf16.msra.mxu0 %v904
    %918 = vmatpush.bf16.msra.mxu0 %v903
    %919 = vmatpush.bf16.msra.mxu0 %v902
    %920 = vmatpush.bf16.msra.mxu0 %v901
    %921 = vmatpush.bf16.msra.mxu0 %v900
    %922 = vmatpush.bf16.msra.mxu0 %v899
    %923 = vmatmul.bf16.gmra.mxu0 %v846
    %v924 = vpop.f32.mrf.mxu0
    %v925 = vadd.f32 %v865, %v924
    %v926 = vpop.f32.mrf.mxu0
    %927 = vdwg.mxu0
    %v928 = vmax.f32 %v925, 0.0
    %v929 = vpack.c.bf16 %v928, %v928
    %v930 = vld [vmem:[#allocation10] sm:$0xff]
    %v931 = vld [vmem:[#allocation10 + $0x8] sm:$0xff]
    %v932 = vld [vmem:[#allocation10 + $0x10] sm:$0xff]
    %v933 = vld [vmem:[#allocation10 + $0x18] sm:$0xff]
    %v934 = vld [vmem:[#allocation10 + $0x20] sm:$0xf]
    %v935 = vld [vmem:[#allocation10 + $0x24] sm:$0xff]
    %v936 = vld [vmem:[#allocation10 + $0x2c] sm:$0xff]
    %v937 = vld [vmem:[#allocation10 + $0x34] sm:$0xff]
    %v938 = vld [vmem:[#allocation10 + $0x3c] sm:$0xff]
    %v939 = vld [vmem:[#allocation10 + $0x44] sm:$0xf]
    %v940 = vld [vmem:[#allocation10 + $0x48] sm:$0xff]
    %v941 = vld [vmem:[#allocation10 + $0x50] sm:$0xff]
    %v942 = vld [vmem:[#allocation10 + $0x58] sm:$0xff]
    %v943 = vld [vmem:[#allocation10 + $0x60] sm:$0xff]
    %v944 = vld [vmem:[#allocation10 + $0x68] sm:$0xf]
    %v945 = vld [vmem:[#allocation10 + $0x6c] sm:$0xff]
    %v946 = vld [vmem:[#allocation10 + $0x74] sm:$0xff]
    %v947 = vld [vmem:[#allocation10 + $0x7c] sm:$0xff]
    %v948 = vld [vmem:[#allocation10 + $0x84] sm:$0xff]
    %v949 = vld [vmem:[#allocation10 + $0x8c] sm:$0xf]
    %v950 = vld [vmem:[#allocation10 + $0x90] sm:$0xff]
    %v951 = vld [vmem:[#allocation10 + $0x98] sm:$0xff]
    %v952 = vld [vmem:[#allocation10 + $0xa0] sm:$0xff]
    %v953 = vld [vmem:[#allocation10 + $0xa8] sm:$0xff]
    %v954 = vld [vmem:[#allocation10 + $0xb0] sm:$0xf]
    %v955 = vld [vmem:[#allocation10 + $0xb4] sm:$0xff]
    %v956 = vld [vmem:[#allocation10 + $0xbc] sm:$0xff]
    %v957 = vld [vmem:[#allocation10 + $0xc4] sm:$0xff]
    %v958 = vld [vmem:[#allocation10 + $0xcc] sm:$0xff]
    %v959 = vld [vmem:[#allocation10 + $0xd4] sm:$0xf]
    %v960 = vld [vmem:[#allocation10 + $0xd8] sm:$0xff]
    %v961 = vld [vmem:[#allocation10 + $0xe0] sm:$0xff]
    %v962 = vld [vmem:[#allocation10 + $0xe8] sm:$0xff]
    %v963 = vld [vmem:[#allocation10 + $0xf0] sm:$0xff]
    %v964 = vld [vmem:[#allocation10 + $0xf8] sm:$0xf]
    %v965 = vld [vmem:[#allocation10 + $0xfc] sm:$0xff]
    %v966 = vld [vmem:[#allocation10 + $0x104] sm:$0xff]
    %v967 = vld [vmem:[#allocation10 + $0x10c] sm:$0xff]
    %v968 = vld [vmem:[#allocation10 + $0x114] sm:$0xff]
    %v969 = vld [vmem:[#allocation10 + $0x11c] sm:$0xf]
    %v970 = vld [vmem:[#allocation10 + $0x120] sm:$0xff]
    %v971 = vld [vmem:[#allocation10 + $0x128] sm:$0xff]
    %v972 = vld [vmem:[#allocation10 + $0x130] sm:$0xff]
    %v973 = vld [vmem:[#allocation10 + $0x138] sm:$0xff]
    %v974 = vld [vmem:[#allocation10 + $0x140] sm:$0xf]
    %v975 = vld [vmem:[#allocation10 + $0x144] sm:$0xff]
    %v976 = vld [vmem:[#allocation10 + $0x14c] sm:$0xff]
    %v977 = vld [vmem:[#allocation10 + $0x154] sm:$0xff]
    %v978 = vld [vmem:[#allocation10 + $0x15c] sm:$0xff]
    %v979 = vld [vmem:[#allocation10 + $0x164] sm:$0xf]
    %v980 = vld [vmem:[#allocation10 + $0x168] sm:$0xff]
    %v981 = vld [vmem:[#allocation10 + $0x170] sm:$0xff]
    %v982 = vld [vmem:[#allocation10 + $0x178] sm:$0xff]
    %v983 = vld [vmem:[#allocation10 + $0x180] sm:$0xff]
    %v984 = vld [vmem:[#allocation10 + $0x188] sm:$0xf]
    %v985 = vld [vmem:[#allocation10 + $0x18c] sm:$0xff]
    %v986 = vld [vmem:[#allocation10 + $0x194] sm:$0xff]
    %v987 = vld [vmem:[#allocation10 + $0x19c] sm:$0xff]
    %v988 = vld [vmem:[#allocation10 + $0x1a4] sm:$0xff]
    %v989 = vld [vmem:[#allocation10 + $0x1ac] sm:$0xf]
    %v990 = vld [vmem:[#allocation10 + $0x1b0] sm:$0xff]
    %v991 = vld [vmem:[#allocation10 + $0x1b8] sm:$0xff]
    %v992 = vld [vmem:[#allocation10 + $0x1c0] sm:$0xff]
    %v993 = vld [vmem:[#allocation10 + $0x1c8] sm:$0xff]
    %v994 = vld [vmem:[#allocation10 + $0x1d0] sm:$0xf]
    %v995 = vld [vmem:[#allocation10 + $0x1d4] sm:$0xff]
    %v996 = vld [vmem:[#allocation10 + $0x1dc] sm:$0xff]
    %v997 = vld [vmem:[#allocation10 + $0x1e4] sm:$0xff]
    %v998 = vld [vmem:[#allocation10 + $0x1ec] sm:$0xff]
    %v999 = vld [vmem:[#allocation10 + $0x1f4] sm:$0xf]
    %v1000 = vld [vmem:[#allocation10 + $0x1f8] sm:$0xff]
    %v1001 = vld [vmem:[#allocation10 + $0x200] sm:$0xff]
    %v1002 = vld [vmem:[#allocation10 + $0x208] sm:$0xff]
    %v1003 = vld [vmem:[#allocation10 + $0x210] sm:$0xff]
    %v1004 = vld [vmem:[#allocation10 + $0x218] sm:$0xf]
    %v1005 = vld [vmem:[#allocation10 + $0x21c] sm:$0xff]
    %v1006 = vld [vmem:[#allocation10 + $0x224] sm:$0xff]
    %v1007 = vld [vmem:[#allocation10 + $0x22c] sm:$0xff]
    %v1008 = vld [vmem:[#allocation10 + $0x234] sm:$0xff]
    %v1009 = vld [vmem:[#allocation10 + $0x23c] sm:$0xf]
    %v1010 = vld [vmem:[#allocation11] sm:$0xff]
    %v1011 = vld [vmem:[#allocation11 + $0x8] sm:$0x1]
    %v1014 = vperm.slane %v1010, 0
    %v1015 = vperm.slane %v1010, 1
    %v1016 = vperm.slane %v1010, 2
    %v1017 = vperm.slane %v1010, 3
    %v1018 = vperm.slane %v1010, 4
    %v1019 = vperm.slane %v1010, 5
    %v1020 = vperm.slane %v1010, 6
    %v1021 = vperm.slane %v1010, 7
    %v1022 = vperm.slane %v1011, 0
    %v1112 = vunpack.c.l.b16 %v930
    %v1113 = vunpack.c.h.b16 %v930
    %v1114 = vunpack.c.l.b16 %v931
    %v1115 = vunpack.c.h.b16 %v931
    %v1116 = vunpack.c.l.b16 %v932
    %v1117 = vunpack.c.h.b16 %v932
    %v1118 = vunpack.c.l.b16 %v933
    %v1119 = vunpack.c.h.b16 %v933
    %v1120 = vunpack.c.l.b16 %v934
    %v1121 = vunpack.c.l.b16 %v935
    %v1122 = vunpack.c.h.b16 %v935
    %v1123 = vunpack.c.l.b16 %v936
    %v1124 = vunpack.c.h.b16 %v936
    %v1125 = vunpack.c.l.b16 %v937
    %v1126 = vunpack.c.h.b16 %v937
    %v1127 = vunpack.c.l.b16 %v938
    %v1128 = vunpack.c.h.b16 %v938
    %v1129 = vunpack.c.l.b16 %v939
    %v1130 = vunpack.c.l.b16 %v940
    %v1131 = vunpack.c.h.b16 %v940
    %v1132 = vunpack.c.l.b16 %v941
    %v1133 = vunpack.c.h.b16 %v941
    %v1134 = vunpack.c.l.b16 %v942
    %v1135 = vunpack.c.h.b16 %v942
    %v1136 = vunpack.c.l.b16 %v943
    %v1137 = vunpack.c.h.b16 %v943
    %v1138 = vunpack.c.l.b16 %v944
    %v1139 = vunpack.c.l.b16 %v945
    %v1140 = vunpack.c.h.b16 %v945
    %v1141 = vunpack.c.l.b16 %v946
    %v1142 = vunpack.c.h.b16 %v946
    %v1143 = vunpack.c.l.b16 %v947
    %v1144 = vunpack.c.h.b16 %v947
    %v1145 = vunpack.c.l.b16 %v948
    %v1146 = vunpack.c.h.b16 %v948
    %v1147 = vunpack.c.l.b16 %v949
    %v1148 = vunpack.c.l.b16 %v950
    %v1149 = vunpack.c.h.b16 %v950
    %v1150 = vunpack.c.l.b16 %v951
    %v1151 = vunpack.c.h.b16 %v951
    %v1152 = vunpack.c.l.b16 %v952
    %v1153 = vunpack.c.h.b16 %v952
    %v1154 = vunpack.c.l.b16 %v953
    %v1155 = vunpack.c.h.b16 %v953
    %v1156 = vunpack.c.l.b16 %v954
    %v1157 = vunpack.c.l.b16 %v955
    %v1158 = vunpack.c.h.b16 %v955
    %v1159 = vunpack.c.l.b16 %v956
    %v1160 = vunpack.c.h.b16 %v956
    %v1161 = vunpack.c.l.b16 %v957
    %v1162 = vunpack.c.h.b16 %v957
    %v1163 = vunpack.c.l.b16 %v958
    %v1164 = vunpack.c.h.b16 %v958
    %v1165 = vunpack.c.l.b16 %v959
    %v1166 = vunpack.c.l.b16 %v960
    %v1167 = vunpack.c.h.b16 %v960
    %v1168 = vunpack.c.l.b16 %v961
    %v1169 = vunpack.c.h.b16 %v961
    %v1170 = vunpack.c.l.b16 %v962
    %v1171 = vunpack.c.h.b16 %v962
    %v1172 = vunpack.c.l.b16 %v963
    %v1173 = vunpack.c.h.b16 %v963
    %v1174 = vunpack.c.l.b16 %v964
    %v1175 = vunpack.c.l.b16 %v965
    %v1176 = vunpack.c.h.b16 %v965
    %v1177 = vunpack.c.l.b16 %v966
    %v1178 = vunpack.c.h.b16 %v966
    %v1179 = vunpack.c.l.b16 %v967
    %v1180 = vunpack.c.h.b16 %v967
    %v1181 = vunpack.c.l.b16 %v968
    %v1182 = vunpack.c.h.b16 %v968
    %v1183 = vunpack.c.l.b16 %v969
    %v1184 = vunpack.c.l.b16 %v970
    %v1185 = vunpack.c.h.b16 %v970
    %v1186 = vunpack.c.l.b16 %v971
    %v1187 = vunpack.c.h.b16 %v971
    %v1188 = vunpack.c.l.b16 %v972
    %v1189 = vunpack.c.h.b16 %v972
    %v1190 = vunpack.c.l.b16 %v973
    %v1191 = vunpack.c.h.b16 %v973
    %v1192 = vunpack.c.l.b16 %v974
    %v1193 = vunpack.c.l.b16 %v975
    %v1194 = vunpack.c.h.b16 %v975
    %v1195 = vunpack.c.l.b16 %v976
    %v1196 = vunpack.c.h.b16 %v976
    %v1197 = vunpack.c.l.b16 %v977
    %v1198 = vunpack.c.h.b16 %v977
    %v1199 = vunpack.c.l.b16 %v978
    %v1200 = vunpack.c.h.b16 %v978
    %v1201 = vunpack.c.l.b16 %v979
    %v1202 = vunpack.c.l.b16 %v980
    %v1203 = vunpack.c.h.b16 %v980
    %v1204 = vunpack.c.l.b16 %v981
    %v1205 = vunpack.c.h.b16 %v981
    %v1206 = vunpack.c.l.b16 %v982
    %v1207 = vunpack.c.h.b16 %v982
    %v1208 = vunpack.c.l.b16 %v983
    %v1209 = vunpack.c.h.b16 %v983
    %v1210 = vunpack.c.l.b16 %v984
    %v1211 = vunpack.c.l.b16 %v985
    %v1212 = vunpack.c.h.b16 %v985
    %v1213 = vunpack.c.l.b16 %v986
    %v1214 = vunpack.c.h.b16 %v986
    %v1215 = vunpack.c.l.b16 %v987
    %v1216 = vunpack.c.h.b16 %v987
    %v1217 = vunpack.c.l.b16 %v988
    %v1218 = vunpack.c.h.b16 %v988
    %v1219 = vunpack.c.l.b16 %v989
    %v1220 = vunpack.c.l.b16 %v990
    %v1221 = vunpack.c.h.b16 %v990
    %v1222 = vunpack.c.l.b16 %v991
    %v1223 = vunpack.c.h.b16 %v991
    %v1224 = vunpack.c.l.b16 %v992
    %v1225 = vunpack.c.h.b16 %v992
    %v1226 = vunpack.c.l.b16 %v993
    %v1227 = vunpack.c.h.b16 %v993
    %v1228 = vunpack.c.l.b16 %v994
    %v1229 = vunpack.c.l.b16 %v995
    %v1230 = vunpack.c.h.b16 %v995
    %v1231 = vunpack.c.l.b16 %v996
    %v1232 = vunpack.c.h.b16 %v996
    %v1233 = vunpack.c.l.b16 %v997
    %v1234 = vunpack.c.h.b16 %v997
    %v1235 = vunpack.c.l.b16 %v998
    %v1236 = vunpack.c.h.b16 %v998
    %v1237 = vunpack.c.l.b16 %v999
    %v1238 = vunpack.c.l.b16 %v1000
    %v1239 = vunpack.c.h.b16 %v1000
    %v1240 = vunpack.c.l.b16 %v1001
    %v1241 = vunpack.c.h.b16 %v1001
    %v1242 = vunpack.c.l.b16 %v1002
    %v1243 = vunpack.c.h.b16 %v1002
    %v1244 = vunpack.c.l.b16 %v1003
    %v1245 = vunpack.c.h.b16 %v1003
    %v1246 = vunpack.c.l.b16 %v1004
    %v1247 = vunpack.c.l.b16 %v1005
    %v1248 = vunpack.c.h.b16 %v1005
    %v1249 = vunpack.c.l.b16 %v1006
    %v1250 = vunpack.c.h.b16 %v1006
    %v1251 = vunpack.c.l.b16 %v1007
    %v1252 = vunpack.c.h.b16 %v1007
    %v1253 = vunpack.c.l.b16 %v1008
    %v1254 = vunpack.c.h.b16 %v1008
    %v1255 = vunpack.c.l.b16 %v1009
    %v1256 = vpack.c.b16 %v1121, %v1112
    %v1257 = vpack.c.b16 %v1122, %v1113
    %v1258 = vpack.c.b16 %v1123, %v1114
    %v1259 = vpack.c.b16 %v1124, %v1115
    %v1260 = vpack.c.b16 %v1125, %v1116
    %v1261 = vpack.c.b16 %v1126, %v1117
    %v1262 = vpack.c.b16 %v1127, %v1118
    %v1263 = vpack.c.b16 %v1128, %v1119
    %v1264 = vpack.c.b16 %v1129, %v1120
    %v1265 = vpack.c.b16 %v1139, %v1130
    %v1266 = vpack.c.b16 %v1140, %v1131
    %v1267 = vpack.c.b16 %v1141, %v1132
    %v1268 = vpack.c.b16 %v1142, %v1133
    %v1269 = vpack.c.b16 %v1143, %v1134
    %v1270 = vpack.c.b16 %v1144, %v1135
    %v1271 = vpack.c.b16 %v1145, %v1136
    %v1272 = vpack.c.b16 %v1146, %v1137
    %v1273 = vpack.c.b16 %v1147, %v1138
    %v1274 = vpack.c.b16 %v1157, %v1148
    %v1275 = vpack.c.b16 %v1158, %v1149
    %v1276 = vpack.c.b16 %v1159, %v1150
    %v1277 = vpack.c.b16 %v1160, %v1151
    %v1278 = vpack.c.b16 %v1161, %v1152
    %v1279 = vpack.c.b16 %v1162, %v1153
    %v1280 = vpack.c.b16 %v1163, %v1154
    %v1281 = vpack.c.b16 %v1164, %v1155
    %v1282 = vpack.c.b16 %v1165, %v1156
    %v1283 = vpack.c.b16 %v1175, %v1166
    %v1284 = vpack.c.b16 %v1176, %v1167
    %v1285 = vpack.c.b16 %v1177, %v1168
    %v1286 = vpack.c.b16 %v1178, %v1169
    %v1287 = vpack.c.b16 %v1179, %v1170
    %v1288 = vpack.c.b16 %v1180, %v1171
    %v1289 = vpack.c.b16 %v1181, %v1172
    %v1290 = vpack.c.b16 %v1182, %v1173
    %v1291 = vpack.c.b16 %v1183, %v1174
    %v1292 = vpack.c.b16 %v1193, %v1184
    %v1293 = vpack.c.b16 %v1194, %v1185
    %v1294 = vpack.c.b16 %v1195, %v1186
    %v1295 = vpack.c.b16 %v1196, %v1187
    %v1296 = vpack.c.b16 %v1197, %v1188
    %v1297 = vpack.c.b16 %v1198, %v1189
    %v1298 = vpack.c.b16 %v1199, %v1190
    %v1299 = vpack.c.b16 %v1200, %v1191
    %v1300 = vpack.c.b16 %v1201, %v1192
    %v1301 = vpack.c.b16 %v1211, %v1202
    %v1302 = vpack.c.b16 %v1212, %v1203
    %v1303 = vpack.c.b16 %v1213, %v1204
    %v1304 = vpack.c.b16 %v1214, %v1205
    %v1305 = vpack.c.b16 %v1215, %v1206
    %v1306 = vpack.c.b16 %v1216, %v1207
    %v1307 = vpack.c.b16 %v1217, %v1208
    %v1308 = vpack.c.b16 %v1218, %v1209
    %v1309 = vpack.c.b16 %v1219, %v1210
    %v1310 = vpack.c.b16 %v1229, %v1220
    %v1311 = vpack.c.b16 %v1230, %v1221
    %v1312 = vpack.c.b16 %v1231, %v1222
    %v1313 = vpack.c.b16 %v1232, %v1223
    %v1314 = vpack.c.b16 %v1233, %v1224
    %v1315 = vpack.c.b16 %v1234, %v1225
    %v1316 = vpack.c.b16 %v1235, %v1226
    %v1317 = vpack.c.b16 %v1236, %v1227
    %v1318 = vpack.c.b16 %v1237, %v1228
    %v1319 = vpack.c.b16 %v1247, %v1238
    %v1320 = vpack.c.b16 %v1248, %v1239
    %v1321 = vpack.c.b16 %v1249, %v1240
    %v1322 = vpack.c.b16 %v1250, %v1241
    %v1323 = vpack.c.b16 %v1251, %v1242
    %v1324 = vpack.c.b16 %v1252, %v1243
    %v1325 = vpack.c.b16 %v1253, %v1244
    %v1326 = vpack.c.b16 %v1254, %v1245
    %v1327 = vpack.c.b16 %v1255, %v1246
    %1400 = vmatpush.bf16.msra.mxu0 %v1319
    %1401 = vmatpush.bf16.msra.mxu0 %v1310
    %1402 = vmatpush.bf16.msra.mxu0 %v1301
    %1403 = vmatpush.bf16.msra.mxu0 %v1292
    %1404 = vmatpush.bf16.msra.mxu0 %v1283
    %1405 = vmatpush.bf16.msra.mxu0 %v1274
    %1406 = vmatpush.bf16.msra.mxu0 %v1265
    %1407 = vmatpush.bf16.msra.mxu0 %v1256
    %1408 = vmatmul.bf16.gmra.mxu0 %v929
    %v1409 = vpop.f32.mrf.mxu0
    %v1410 = vadd.f32 %v1014, %v1409
    %v1411 = vpop.f32.mrf.mxu0
    %1412 = vdwg.mxu0
    %1413 = vmatpush.bf16.msra.mxu0 %v1320
    %1414 = vmatpush.bf16.msra.mxu0 %v1311
    %1415 = vmatpush.bf16.msra.mxu0 %v1302
    %1416 = vmatpush.bf16.msra.mxu0 %v1293
    %1417 = vmatpush.bf16.msra.mxu0 %v1284
    %1418 = vmatpush.bf16.msra.mxu0 %v1275
    %1419 = vmatpush.bf16.msra.mxu0 %v1266
    %1420 = vmatpush.bf16.msra.mxu0 %v1257
    %1421 = vmatmul.bf16.gmra.mxu0 %v929
    %v1422 = vpop.f32.mrf.mxu0
    %v1423 = vadd.f32 %v1015, %v1422
    %v1424 = vpop.f32.mrf.mxu0
    %1425 = vdwg.mxu0
    %1426 = vmatpush.bf16.msra.mxu0 %v1321
    %1427 = vmatpush.bf16.msra.mxu0 %v1312
    %1428 = vmatpush.bf16.msra.mxu0 %v1303
    %1429 = vmatpush.bf16.msra.mxu0 %v1294
    %1430 = vmatpush.bf16.msra.mxu0 %v1285
    %1431 = vmatpush.bf16.msra.mxu0 %v1276
    %1432 = vmatpush.bf16.msra.mxu0 %v1267
    %1433 = vmatpush.bf16.msra.mxu0 %v1258
    %1434 = vmatmul.bf16.gmra.mxu0 %v929
    %v1435 = vpop.f32.mrf.mxu0
    %v1436 = vadd.f32 %v1016, %v1435
    %v1437 = vpop.f32.mrf.mxu0
    %1438 = vdwg.mxu0
    %1439 = vmatpush.bf16.msra.mxu0 %v1322
    %1440 = vmatpush.bf16.msra.mxu0 %v1313
    %1441 = vmatpush.bf16.msra.mxu0 %v1304
    %1442 = vmatpush.bf16.msra.mxu0 %v1295
    %1443 = vmatpush.bf16.msra.mxu0 %v1286
    %1444 = vmatpush.bf16.msra.mxu0 %v1277
    %1445 = vmatpush.bf16.msra.mxu0 %v1268
    %1446 = vmatpush.bf16.msra.mxu0 %v1259
    %1447 = vmatmul.bf16.gmra.mxu0 %v929
    %v1448 = vpop.f32.mrf.mxu0
    %v1449 = vadd.f32 %v1017, %v1448
    %v1450 = vpop.f32.mrf.mxu0
    %1451 = vdwg.mxu0
    %1452 = vmatpush.bf16.msra.mxu0 %v1323
    %1453 = vmatpush.bf16.msra.mxu0 %v1314
    %1454 = vmatpush.bf16.msra.mxu0 %v1305
    %1455 = vmatpush.bf16.msra.mxu0 %v1296
    %1456 = vmatpush.bf16.msra.mxu0 %v1287
    %1457 = vmatpush.bf16.msra.mxu0 %v1278
    %1458 = vmatpush.bf16.msra.mxu0 %v1269
    %1459 = vmatpush.bf16.msra.mxu0 %v1260
    %1460 = vmatmul.bf16.gmra.mxu0 %v929
    %v1461 = vpop.f32.mrf.mxu0
    %v1462 = vadd.f32 %v1018, %v1461
    %v1463 = vpop.f32.mrf.mxu0
    %1464 = vdwg.mxu0
    %1465 = vmatpush.bf16.msra.mxu0 %v1324
    %1466 = vmatpush.bf16.msra.mxu0 %v1315
    %1467 = vmatpush.bf16.msra.mxu0 %v1306
    %1468 = vmatpush.bf16.msra.mxu0 %v1297
    %1469 = vmatpush.bf16.msra.mxu0 %v1288
    %1470 = vmatpush.bf16.msra.mxu0 %v1279
    %1471 = vmatpush.bf16.msra.mxu0 %v1270
    %1472 = vmatpush.bf16.msra.mxu0 %v1261
    %1473 = vmatmul.bf16.gmra.mxu0 %v929
    %v1474 = vpop.f32.mrf.mxu0
    %v1475 = vadd.f32 %v1019, %v1474
    %v1476 = vpop.f32.mrf.mxu0
    %1477 = vdwg.mxu0
    %1478 = vmatpush.bf16.msra.mxu0 %v1325
    %1479 = vmatpush.bf16.msra.mxu0 %v1316
    %1480 = vmatpush.bf16.msra.mxu0 %v1307
    %1481 = vmatpush.bf16.msra.mxu0 %v1298
    %1482 = vmatpush.bf16.msra.mxu0 %v1289
    %1483 = vmatpush.bf16.msra.mxu0 %v1280
    %1484 = vmatpush.bf16.msra.mxu0 %v1271
    %1485 = vmatpush.bf16.msra.mxu0 %v1262
    %1486 = vmatmul.bf16.gmra.mxu0 %v929
    %v1487 = vpop.f32.mrf.mxu0
    %v1488 = vadd.f32 %v1020, %v1487
    %v1489 = vpop.f32.mrf.mxu0
    %1490 = vdwg.mxu0
    %1491 = vmatpush.bf16.msra.mxu0 %v1326
    %1492 = vmatpush.bf16.msra.mxu0 %v1317
    %1493 = vmatpush.bf16.msra.mxu0 %v1308
    %1494 = vmatpush.bf16.msra.mxu0 %v1299
    %1495 = vmatpush.bf16.msra.mxu0 %v1290
    %1496 = vmatpush.bf16.msra.mxu0 %v1281
    %1497 = vmatpush.bf16.msra.mxu0 %v1272
    %1498 = vmatpush.bf16.msra.mxu0 %v1263
    %1499 = vmatmul.bf16.gmra.mxu0 %v929
    %v1500 = vpop.f32.mrf.mxu0
    %v1501 = vadd.f32 %v1021, %v1500
    %v1502 = vpop.f32.mrf.mxu0
    %1503 = vdwg.mxu0
    %1504 = vmatpush.bf16.msra.mxu0 %v1327
    %1505 = vmatpush.bf16.msra.mxu0 %v1318
    %1506 = vmatpush.bf16.msra.mxu0 %v1309
    %1507 = vmatpush.bf16.msra.mxu0 %v1300
    %1508 = vmatpush.bf16.msra.mxu0 %v1291
    %1509 = vmatpush.bf16.msra.mxu0 %v1282
    %1510 = vmatpush.bf16.msra.mxu0 %v1273
    %1511 = vmatpush.bf16.msra.mxu0 %v1264
    %1512 = vmatmul.bf16.gmra.mxu0 %v929
    %v1513 = vpop.f32.mrf.mxu0
    %v1514 = vadd.f32 %v1022, %v1513
    %v1515 = vpop.f32.mrf.mxu0
    %1516 = vdwg.mxu0
    %1517 = vst [vmem:[#allocation14] sm:$0xff] %v1410
    %1518 = vst [vmem:[#allocation14 + $0x8] sm:$0xff] %v1423
    %1519 = vst [vmem:[#allocation14 + $0x10] sm:$0xff] %v1436
    %1520 = vst [vmem:[#allocation14 + $0x18] sm:$0xff] %v1449
    %1521 = vst [vmem:[#allocation14 + $0x20] sm:$0xff] %v1462
    %1522 = vst [vmem:[#allocation14 + $0x28] sm:$0xff] %v1475
    %1523 = vst [vmem:[#allocation14 + $0x30] sm:$0xff] %v1488
    %1524 = vst [vmem:[#allocation14 + $0x38] sm:$0xff] %v1501
    %1525 = vst [vmem:[#allocation14 + $0x40] sm:$0xff] %v1514
    // Predicated region
    $region62: #{tpu_custom_call.1} parent=1 // pred_check
      _
    $region63: #{tpu_custom_call.1} parent=1 // pred_check_branch
      %1527 = sbr.rel (0) target = $region65
    $region64: #{tpu_custom_call.1} parent=1 // pred_region
      %1529 = vsyncadd [#allocation4], 0
      %s1531 = sshll.u32 [#allocation13], 4
      %s1532 = int_to_ptr.vmem [resolvable:$true] %s1531
      %s1533 = sshll.u32 %s9, 4
      %s1534 = int_to_ptr.hbm [resolvable:$true] %s1533
      %1536 = dma.vmem_to_hbm [thread:$0]  %s1532, 128, %s1534, [#allocation4]
    $region65: #{tpu_custom_call.1} parent=1 // pred_fallthru
      _
    // Predicated region
    $region66: #{tpu_custom_call.1} parent=1 // pred_check
      _
    $region67: #{tpu_custom_call.1} parent=1 // pred_check_branch
      %1538 = sbr.rel (0) target = $region69
    $region68: #{tpu_custom_call.1} parent=1 // pred_region
      %1540 = vsyncadd [#allocation15], 0
      %s1542 = sshll.u32 [#allocation14], 4
      %s1543 = int_to_ptr.vmem [resolvable:$true] %s1542
      %s1544 = sshll.u32 %s10, 4
      %s1545 = int_to_ptr.hbm [resolvable:$true] %s1544
      %1547 = dma.vmem_to_hbm [thread:$0]  %s1543, 1152, %s1545, [#allocation15]
    $region69: #{tpu_custom_call.1} parent=1 // pred_fallthru
      _
    // Predicated region
    $region70: #{tpu_custom_call.1} parent=1 // pred_check
      _
    $region71: #{tpu_custom_call.1} parent=1 // pred_check_branch
      %1549 = sbr.rel (0) target = $region73
    $region72: #{tpu_custom_call.1} parent=1 // pred_region
      %1551 = dma.done [#allocation4], 128
    $region73: #{tpu_custom_call.1} parent=1 // pred_fallthru
      _
    // Predicated region
    $region74: #{tpu_custom_call.1} parent=1 // pred_check
      _
    $region75: #{tpu_custom_call.1} parent=1 // pred_check_branch
      %1553 = sbr.rel (0) target = $region77
    $region76: #{tpu_custom_call.1} parent=1 // pred_region
      %1555 = dma.done [#allocation15], 1152
    $region77: #{tpu_custom_call.1} parent=1 // pred_fallthru
      _
    %1556 = vsyncpa [#allocation3], 1
    %1557 = vsyncpa [#allocation6], 1
    %1558 = vsyncpa [#allocation9], 1
    %1559 = vsyncpa [#allocation12], 1
    %1560 = vsyncpa [#allocation4], 1
    %1561 = vsyncpa [#allocation15], 1

</llo_original>
